<compile_context>
chip_gen: v7x
topology: tpu7x:2x2x1
jax: 0.10.0
libtpu: 0.0.40
codegen_flags: <defaults>
</compile_context>

<pallas_src>
import functools
import math

import jax
import jax.numpy as jnp
from jax.experimental import pallas as pl
from jax.experimental.pallas import tpu as pltpu

LANE = 128


def _round_up(x, m):
    return ((x + m - 1) // m) * m


# --------------------------------------------------------------------------
# Pallas kernel
# --------------------------------------------------------------------------
def make_odr_kernel(num_dec_layers, z_dim, tc_pad, sc_pad, fuse_reparam,
                    compute_dtype):
    """Builds the fused forward kernel for a fixed number of decoder layers."""

    def _mm(x, w_ref):
        # Weights already arrive in compute_dtype (cast once, host-side); only the
        # fresh per-step LHS activation is cast here.  f32 accumulation on the MXU.
        return jnp.dot(x.astype(compute_dtype), w_ref[...],
                       preferred_element_type=jnp.float32)

    def _linear(x, w_ref, b_ref, relu=False):
        y = _mm(x, w_ref) + b_ref[...].astype(jnp.float32)
        return jnp.maximum(y, 0.0) if relu else y

    def kernel(*refs):
        it = iter(refs)
        nxt = lambda: next(it)

        # ---- inputs --------------------------------------------------
        x_ref = nxt()
        fc1_w, fc1_b = nxt(), nxt()          # cusMLP backbone fc1
        enc_w, enc_b = nxt(), nxt()          # encoder1_net ‖ encoder2_net (fused)
        hd_w, hd_b = nxt(), nxt()            # block-diag heads [mt|ms|lvt|lvs]
        if fuse_reparam:
            noise_ref = nxt()                # blockdiag(noise1, noise2) (2z, 2z)
        else:
            n1_ref, n2_ref = nxt(), nxt()    # separate 128x128 noise matrices
        dec1 = [(nxt(), nxt()) for _ in range(num_dec_layers)]
        dec2 = [(nxt(), nxt()) for _ in range(num_dec_layers)]
        o1w, o1b = nxt(), nxt()              # output_1 (lane-padded to 128)
        o2w, o2b = nxt(), nxt()              # output_2 (lane-padded to 128)

        # ---- outputs (3 wide, lane-dense slabs) ----------------------
        mlv_o, z12_o, heads_o = nxt(), nxt(), nxt()

        # ---- encoder (ODR_Encoder_MLP) -------------------------------
        x = x_ref[...]
        hidden = _linear(x, fc1_w, fc1_b, relu=True)     # cusMLP hidden (fc2=Identity)
        enc = _linear(hidden, enc_w, enc_b, relu=True)   # [relu(out_1) | relu(out_2)]
        mlv = _linear(enc, hd_w, hd_b)                   # [mean_t|mean_s|lv_t|lv_s]
        mean_ts = mlv[:, :2 * z_dim]                     # 128-aligned lane slices
        logvar_ts = mlv[:, 2 * z_dim:]

        # ---- reparameterization_ODR ----------------------------------
        # z = mean + exp(log_var/2) @ noise   (noise precomputed on host).
        scale = jnp.exp(logvar_ts * 0.5)                 # EUP slot
        if fuse_reparam:
            z12 = mean_ts + _mm(scale, noise_ref)        # one 256-wide MXU pass
            z1 = z12[:, :z_dim]
            z2 = z12[:, z_dim:]
            z12_o[...] = z12
        else:
            z1 = mlv[:, :z_dim] + _mm(scale[:, :z_dim], n1_ref)
            z2 = mlv[:, z_dim:2 * z_dim] + _mm(scale[:, z_dim:], n2_ref)
            z12_o[:, :z_dim] = z1
            z12_o[:, z_dim:] = z2

        # ---- decoder (Tabular_ModelDecoder_MLP) -----------------------
        h = z1
        for (w, b) in dec1:
            h = _linear(h, w, b, relu=True)
        y_zt = _linear(h, o1w, o1b)                      # [TB, tc_pad]

        # Decoder_2 / output_2 weights shared by both streams; weights are
        # VMEM-resident, so just run the chain twice (no row-stack copy).
        d1, d2 = z1, z2
        for (w, b) in dec2:
            d1 = _linear(d1, w, b, relu=True)
            d2 = _linear(d2, w, b, relu=True)
        s_zt = _linear(d1, o2w, o2b)                     # [TB, sc_pad]
        s_zs = _linear(d2, o2w, o2b)                     # [TB, sc_pad]

        # ---- write outputs (all lane-dense, 128-aligned offsets) ------
        mlv_o[...] = mlv
        heads_o[:, :tc_pad] = y_zt
        heads_o[:, tc_pad:tc_pad + sc_pad] = s_zt
        heads_o[:, tc_pad + sc_pad:] = s_zs

    return kernel


# --------------------------------------------------------------------------
# Wrapper
# --------------------------------------------------------------------------
def odr_forward(x, params, noise1, noise2, *, block_rows=1024,
                compute_dtype=jnp.float32, fuse_reparam=True):
    # compute_dtype=jnp.bfloat16 is the recommended production setting on
    # v5e/v6e/v7x (bf16-native MXU); keep f32 for tight-tolerance testing.
    # fuse_reparam=False is preferable on v5e (128x128 MXU).
    (fc1, enc1, enc2, me1, lv1, me2, lv2, dec1, dec2, out1, out2) = params
    num_dec_layers = len(dec1)
    B, in_features = x.shape
    hidden_features = fc1[0].shape[1]
    input_dim = enc1[0].shape[1]
    z_dim = me1[0].shape[1]
    target_classes = out1[0].shape[1]
    sensitive_classes = out2[0].shape[1]
    last_hidden = out1[0].shape[0]
    f32 = jnp.float32
    cdt = compute_dtype

    # ---- batch tiling --------------------------------------------------
    TB = _round_up(min(block_rows, _round_up(B, 8)), 8)
    B_pad = _round_up(B, TB)
    x_p = x if B_pad == B else jnp.pad(x, ((0, B_pad - B), (0, 0)))
    x_p = x_p.astype(cdt)
    grid = (B_pad // TB,)

    # ---- weight packing (done once, host-side; cast to compute_dtype) ---
    cast = lambda a: a.astype(cdt)

    fc1_w, fc1_b = cast(fc1[0]), cast(fc1[1])
    enc_w = cast(jnp.concatenate([enc1[0], enc2[0]], axis=1))
    enc_b = cast(jnp.concatenate([enc1[1], enc2[1]], axis=1))

    # Block-diagonal head weights; columns = [mean_t | mean_s | log_var_t | log_var_s].
    hd_w = jnp.zeros((2 * input_dim, 4 * z_dim), f32)
    hd_w = hd_w.at[:input_dim, :z_dim].set(me1[0])
    hd_w = hd_w.at[input_dim:, z_dim:2 * z_dim].set(me2[0])
    hd_w = hd_w.at[:input_dim, 2 * z_dim:3 * z_dim].set(lv1[0])
    hd_w = hd_w.at[input_dim:, 3 * z_dim:].set(lv2[0])
    hd_w = cast(hd_w)
    hd_b = cast(jnp.concatenate([me1[1], me2[1], lv1[1], lv2[1]], axis=1))

    if fuse_reparam:
        noise_bd = jnp.zeros((2 * z_dim, 2 * z_dim), f32)
        noise_bd = noise_bd.at[:z_dim, :z_dim].set(noise1)
        noise_bd = noise_bd.at[z_dim:, z_dim:].set(noise2)
        noise_in = [cast(noise_bd)]
    else:
        noise_in = [cast(noise1), cast(noise2)]

    tc_pad = _round_up(target_classes, LANE)
    sc_pad = _round_up(sensitive_classes, LANE)
    o1w = cast(jnp.pad(out1[0], ((0, 0), (0, tc_pad - target_classes))))
    o1b = cast(jnp.pad(out1[1], ((0, 0), (0, tc_pad - target_classes))))
    o2w = cast(jnp.pad(out2[0], ((0, 0), (0, sc_pad - sensitive_classes))))
    o2b = cast(jnp.pad(out2[1], ((0, 0), (0, sc_pad - sensitive_classes))))

    flat_in = [x_p, fc1_w, fc1_b, enc_w, enc_b, hd_w, hd_b] + noise_in
    for (w, b) in dec1 + dec2:
        flat_in += [cast(w), cast(b)]
    flat_in += [o1w, o1b, o2w, o2b]

    # ---- specs ----------------------------------------------------------
    def resident(arr):
        # Weights / biases / noise: whole array, same block every grid step.
        return pl.BlockSpec(arr.shape, lambda i, nd=arr.ndim: (0,) * nd)

    x_spec = pl.BlockSpec((TB, in_features), lambda i: (i, 0))
    in_specs = [x_spec] + [resident(a) for a in flat_in[1:]]

    out_cols = (4 * z_dim, 2 * z_dim, tc_pad + 2 * sc_pad)   # mlv, z12, heads
    out_shape = tuple(jax.ShapeDtypeStruct((B_pad, n), f32) for n in out_cols)
    out_specs = tuple(pl.BlockSpec((TB, n), lambda i: (i, 0)) for n in out_cols)

    # ---- cost estimate (static python ints, jit-safe) --------------------
    def mm_flops(m, k, n):
        return 2 * m * k * n

    flops = (mm_flops(B_pad, in_features, hidden_features)
             + mm_flops(B_pad, hidden_features, 2 * input_dim)
             + mm_flops(B_pad, 2 * input_dim, 4 * z_dim)
             + mm_flops(B_pad, 2 * z_dim, 2 * z_dim))
    for (w, _) in dec1:
        flops += mm_flops(B_pad, w.shape[0], w.shape[1])
    for (w, _) in dec2:
        flops += 2 * mm_flops(B_pad, w.shape[0], w.shape[1])
    flops += mm_flops(B_pad, last_hidden, tc_pad)
    flops += 2 * mm_flops(B_pad, last_hidden, sc_pad)
    transcendentals = 2 * B_pad * z_dim
    bytes_accessed = sum(math.prod(a.shape) * a.dtype.itemsize for a in flat_in)
    bytes_accessed += sum(math.prod(s.shape) * 4 for s in out_shape)
    cost = pl.CostEstimate(flops=int(flops), transcendentals=int(transcendentals),
                           bytes_accessed=int(bytes_accessed))

    # ---- VMEM budget (scales with TB; stays within v7x's 64 MiB) ---------
    w_bytes = sum(math.prod(a.shape) * a.dtype.itemsize for a in flat_in[1:])
    io_per_step = TB * (in_features * x_p.dtype.itemsize + sum(out_cols) * 4)
    act_width = max(hidden_features, 2 * input_dim, 4 * z_dim)
    vmem_est = 2 * io_per_step + 2 * w_bytes + 8 * TB * act_width * 4
    vmem_limit = int(min(112 * 2 ** 20, max(32 * 2 ** 20, vmem_est)))

    mlv, z12, heads = pl.pallas_call(
        make_odr_kernel(num_dec_layers, z_dim, tc_pad, sc_pad, fuse_reparam, cdt),
        out_shape=out_shape,
        grid=grid,
        in_specs=in_specs,
        out_specs=out_specs,
        compiler_params=pltpu.CompilerParams(
            dimension_semantics=("parallel",),
            vmem_limit_bytes=vmem_limit),
        cost_estimate=cost,
    )(*flat_in)

    z = z_dim
    mean_t = mlv[:B, :z]
    mean_s = mlv[:B, z:2 * z]
    log_var_t = mlv[:B, 2 * z:3 * z]
    log_var_s = mlv[:B, 3 * z:]
    z1 = z12[:B, :z]
    z2 = z12[:B, z:]
    y_zt = heads[:B, :target_classes]
    s_zt = heads[:B, tc_pad:tc_pad + sensitive_classes]
    s_zs = heads[:B, tc_pad + sc_pad:tc_pad + sc_pad + sensitive_classes]
    return (mean_t, mean_s, log_var_t, log_var_s, y_zt, s_zt, s_zs, z1, z2)


# --------------------------------------------------------------------------
# Pure-JAX reference (same math, no Pallas) for the correctness check
# --------------------------------------------------------------------------
def reference_forward(x, params, noise1, noise2):
    (fc1, enc1, enc2, me1, lv1, me2, lv2, dec1, dec2, out1, out2) = params
    lin = lambda v, p: v @ p[0] + p[1]
    relu = lambda v: jnp.maximum(v, 0.0)

    hidden = relu(lin(x, fc1))
    o1, o2 = lin(hidden, enc1), lin(hidden, enc2)
    a1, a2 = relu(o1), relu(o2)
    mean_t, log_var_t = lin(a1, me1), lin(a1, lv1)
    mean_s, log_var_s = lin(a2, me2), lin(a2, lv2)
    z1 = mean_t + jnp.exp(log_var_t * 0.5) @ noise1
    z2 = mean_s + jnp.exp(log_var_s * 0.5) @ noise2

    h1 = z1
    for p in dec1:
        h1 = relu(lin(h1, p))
    y_zt = lin(h1, out1)
    d1, d2 = z1, z2
    for p in dec2:
        d1, d2 = relu(lin(d1, p)), relu(lin(d2, p))
    s_zt, s_zs = lin(d1, out2), lin(d2, out2)
    return (mean_t, mean_s, log_var_t, log_var_s, y_zt, s_zt, s_zs, z1, z2)


# --------------------------------------------------------------------------
# Deterministic parameter construction + run
# --------------------------------------------------------------------------
def init_linear(key, fan_in, fan_out):
    kw, kb = jax.random.split(key)
    bound = 1.0 / jnp.sqrt(jnp.float32(fan_in))
    w = jax.random.uniform(kw, (fan_in, fan_out), jnp.float32, -bound, bound)
    b = jax.random.uniform(kb, (1, fan_out), jnp.float32, -bound, bound)
    return (w, b)


if __name__ == "__main__":
    key = jax.random.PRNGKey(0)

    # Small shapes consistent with the module.
    B = 16
    in_features = 16
    hidden_features = 32
    input_dim = 32
    z_dim = 128            # fixed: reparameterization_ODR hard-codes a 128x128 noise matrix
    hidden_dim = [64, 32]
    target_classes = 4
    sensitive_classes = 2

    keys = iter(jax.random.split(key, 32))

    fc1 = init_linear(next(keys), in_features, hidden_features)
    enc1 = init_linear(next(keys), hidden_features, input_dim)
    enc2 = init_linear(next(keys), hidden_features, input_dim)
    me1 = init_linear(next(keys), input_dim, z_dim)
    lv1 = init_linear(next(keys), input_dim, z_dim)
    me2 = init_linear(next(keys), input_dim, z_dim)
    lv2 = init_linear(next(keys), input_dim, z_dim)

    dims = [z_dim] + hidden_dim
    dec1 = [init_linear(next(keys), dims[i - 1], dims[i]) for i in range(1, len(dims))]
    dec2 = [init_linear(next(keys), dims[i - 1], dims[i]) for i in range(1, len(dims))]
    out1 = init_linear(next(keys), dims[-1], target_classes)
    out2 = init_linear(next(keys), dims[-1], sensitive_classes)

    params = (fc1, enc1, enc2, me1, lv1, me2, lv2, dec1, dec2, out1, out2)

    x = jax.random.normal(next(keys), (B, in_features), jnp.float32)

    # Deterministic equivalent of torch.normal(mean_vec, eye(128)):
    # element [i,j] ~ N(mean_vec[j], eye[i,j])  -> mean_vec[j] + (i==j)*eps[i,j]
    mean_1 = jnp.zeros((z_dim,), jnp.float32).at[13].set(1.0)
    mean_2 = jnp.ones((z_dim,), jnp.float32).at[13].set(0.0)
    eye = jnp.eye(z_dim, dtype=jnp.float32)
    eps1 = jax.random.normal(next(keys), (z_dim, z_dim), jnp.float32)
    eps2 = jax.random.normal(next(keys), (z_dim, z_dim), jnp.float32)
    noise1 = mean_1[None, :] + eye * eps1
    noise2 = mean_2[None, :] + eye * eps2

    refs = reference_forward(x, params, noise1, noise2)

    # 1) f32, fused reparam, small tile -> exercises a multi-step grid (grid=(2,)).
    fwd_a = jax.jit(functools.partial(odr_forward, block_rows=8,
                                      compute_dtype=jnp.float32, fuse_reparam=True))
    outs_a = jax.block_until_ready(fwd_a(x, params, noise1, noise2))
    for got, exp in zip(outs_a, refs):
        assert got.shape == exp.shape and got.dtype == exp.dtype
        assert jnp.allclose(got, exp, rtol=1e-4, atol=1e-4), "f32 fused mismatch"

    # 2) f32, non-fused reparam (v5e-style 128x128 noise matmuls), default tile.
    fwd_b = jax.jit(functools.partial(odr_forward,
                                      compute_dtype=jnp.float32, fuse_reparam=False))
    outs_b = jax.block_until_ready(fwd_b(x, params, noise1, noise2))
    for got, exp in zip(outs_b, refs):
        assert jnp.allclose(got, exp, rtol=1e-4, atol=1e-4), "f32 split mismatch"

    # 3) bf16 compute path (production default on v6e/v7x), loose normalized check.
    fwd_c = jax.jit(functools.partial(odr_forward,
                                      compute_dtype=jnp.bfloat16, fuse_reparam=True))
    outs_c = jax.block_until_ready(fwd_c(x, params, noise1, noise2))
    for got, exp in zip(outs_c, refs):
        assert got.shape == exp.shape
        assert bool(jnp.all(jnp.isfinite(got)))
        rel = jnp.max(jnp.abs(got - exp)) / (jnp.max(jnp.abs(exp)) + 1e-6)
        assert float(rel) < 0.05, "bf16 mismatch beyond tolerance"

    print("KERNEL_OK")
</pallas_src>

<mosaic_0001>
module attributes {stable_mosaic.version = 11 : i64} {
  func.func @kernel(%arg0: i32, %arg1: memref<8x16xf32, #tpu.memory_space<vmem>>, %arg2: memref<16x32xf32, #tpu.memory_space<vmem>>, %arg3: memref<1x32xf32, #tpu.memory_space<vmem>>, %arg4: memref<32x64xf32, #tpu.memory_space<vmem>>, %arg5: memref<1x64xf32, #tpu.memory_space<vmem>>, %arg6: memref<64x512xf32, #tpu.memory_space<vmem>>, %arg7: memref<1x512xf32, #tpu.memory_space<vmem>>, %arg8: memref<256x256xf32, #tpu.memory_space<vmem>>, %arg9: memref<128x64xf32, #tpu.memory_space<vmem>>, %arg10: memref<1x64xf32, #tpu.memory_space<vmem>>, %arg11: memref<64x32xf32, #tpu.memory_space<vmem>>, %arg12: memref<1x32xf32, #tpu.memory_space<vmem>>, %arg13: memref<128x64xf32, #tpu.memory_space<vmem>>, %arg14: memref<1x64xf32, #tpu.memory_space<vmem>>, %arg15: memref<64x32xf32, #tpu.memory_space<vmem>>, %arg16: memref<1x32xf32, #tpu.memory_space<vmem>>, %arg17: memref<32x128xf32, #tpu.memory_space<vmem>>, %arg18: memref<1x128xf32, #tpu.memory_space<vmem>>, %arg19: memref<32x128xf32, #tpu.memory_space<vmem>>, %arg20: memref<1x128xf32, #tpu.memory_space<vmem>>, %arg21: memref<8x512xf32, #tpu.memory_space<vmem>>, %arg22: memref<8x256xf32, #tpu.memory_space<vmem>>, %arg23: memref<8x384xf32, #tpu.memory_space<vmem>>) attributes {dimension_semantics = [#tpu.dimension_semantics<parallel>], iteration_bounds = array<i64: 2>, scalar_prefetch = 0 : i64, scratch_operands = 0 : i64, tpu.core_type = #tpu.core_type<tc>, window_params = [{transform_indices = @transform_0, window_bounds = array<i64: 8, 16>}, {pipeline_mode = #tpu.pipeline_mode<synchronous>, transform_indices = @transform_1, window_bounds = array<i64: 16, 32>}, {pipeline_mode = #tpu.pipeline_mode<synchronous>, transform_indices = @transform_2, window_bounds = array<i64: 1, 32>}, {pipeline_mode = #tpu.pipeline_mode<synchronous>, transform_indices = @transform_3, window_bounds = array<i64: 32, 64>}, {pipeline_mode = #tpu.pipeline_mode<synchronous>, transform_indices = @transform_4, window_bounds = array<i64: 1, 64>}, {pipeline_mode = #tpu.pipeline_mode<synchronous>, transform_indices = @transform_5, window_bounds = array<i64: 64, 512>}, {pipeline_mode = #tpu.pipeline_mode<synchronous>, transform_indices = @transform_6, window_bounds = array<i64: 1, 512>}, {pipeline_mode = #tpu.pipeline_mode<synchronous>, transform_indices = @transform_7, window_bounds = array<i64: 256, 256>}, {pipeline_mode = #tpu.pipeline_mode<synchronous>, transform_indices = @transform_8, window_bounds = array<i64: 128, 64>}, {pipeline_mode = #tpu.pipeline_mode<synchronous>, transform_indices = @transform_9, window_bounds = array<i64: 1, 64>}, {pipeline_mode = #tpu.pipeline_mode<synchronous>, transform_indices = @transform_10, window_bounds = array<i64: 64, 32>}, {pipeline_mode = #tpu.pipeline_mode<synchronous>, transform_indices = @transform_11, window_bounds = array<i64: 1, 32>}, {pipeline_mode = #tpu.pipeline_mode<synchronous>, transform_indices = @transform_12, window_bounds = array<i64: 128, 64>}, {pipeline_mode = #tpu.pipeline_mode<synchronous>, transform_indices = @transform_13, window_bounds = array<i64: 1, 64>}, {pipeline_mode = #tpu.pipeline_mode<synchronous>, transform_indices = @transform_14, window_bounds = array<i64: 64, 32>}, {pipeline_mode = #tpu.pipeline_mode<synchronous>, transform_indices = @transform_15, window_bounds = array<i64: 1, 32>}, {pipeline_mode = #tpu.pipeline_mode<synchronous>, transform_indices = @transform_16, window_bounds = array<i64: 32, 128>}, {pipeline_mode = #tpu.pipeline_mode<synchronous>, transform_indices = @transform_17, window_bounds = array<i64: 1, 128>}, {pipeline_mode = #tpu.pipeline_mode<synchronous>, transform_indices = @transform_18, window_bounds = array<i64: 32, 128>}, {pipeline_mode = #tpu.pipeline_mode<synchronous>, transform_indices = @transform_19, window_bounds = array<i64: 1, 128>}, {transform_indices = @transform_20, window_bounds = array<i64: 8, 512>}, {transform_indices = @transform_21, window_bounds = array<i64: 8, 256>}, {transform_indices = @transform_22, window_bounds = array<i64: 8, 384>}]} {
    %c0 = arith.constant 0 : index
    %c0_0 = arith.constant 0 : index
    %0 = vector.load %arg1[%c0, %c0_0] : memref<8x16xf32, #tpu.memory_space<vmem>>, vector<8x16xf32>
    %c0_1 = arith.constant 0 : index
    %c0_2 = arith.constant 0 : index
    %1 = vector.load %arg2[%c0_1, %c0_2] : memref<16x32xf32, #tpu.memory_space<vmem>>, vector<16x32xf32>
    %cst = arith.constant dense<0.000000e+00> : vector<8x32xf32>
    %2 = tpu.matmul %0, %1, %cst {dimension_numbers = #tpu.dot_dimension_numbers<[1], [0], [0], [1], [0, 0, 1, 1], [], []>} : vector<8x16xf32>, vector<16x32xf32>, vector<8x32xf32> -> vector<8x32xf32>
    %c0_3 = arith.constant 0 : index
    %c0_4 = arith.constant 0 : index
    %3 = vector.load %arg3[%c0_3, %c0_4] : memref<1x32xf32, #tpu.memory_space<vmem>>, vector<1x32xf32>
    %4 = vector.broadcast %3 : vector<1x32xf32> to vector<8x32xf32>
    %5 = arith.addf %2, %4 : vector<8x32xf32>
    %cst_5 = arith.constant 0.000000e+00 : f32
    %6 = vector.broadcast %cst_5 : f32 to vector<8x32xf32>
    %7 = arith.maximumf %5, %6 : vector<8x32xf32>
    %c0_6 = arith.constant 0 : index
    %c0_7 = arith.constant 0 : index
    %8 = vector.load %arg4[%c0_6, %c0_7] : memref<32x64xf32, #tpu.memory_space<vmem>>, vector<32x64xf32>
    %cst_8 = arith.constant dense<0.000000e+00> : vector<8x64xf32>
    %9 = tpu.matmul %7, %8, %cst_8 {dimension_numbers = #tpu.dot_dimension_numbers<[1], [0], [0], [1], [0, 0, 1, 1], [], []>} : vector<8x32xf32>, vector<32x64xf32>, vector<8x64xf32> -> vector<8x64xf32>
    %c0_9 = arith.constant 0 : index
    %c0_10 = arith.constant 0 : index
    %10 = vector.load %arg5[%c0_9, %c0_10] : memref<1x64xf32, #tpu.memory_space<vmem>>, vector<1x64xf32>
    %11 = vector.broadcast %10 : vector<1x64xf32> to vector<8x64xf32>
    %12 = arith.addf %9, %11 : vector<8x64xf32>
    %cst_11 = arith.constant 0.000000e+00 : f32
    %13 = vector.broadcast %cst_11 : f32 to vector<8x64xf32>
    %14 = arith.maximumf %12, %13 : vector<8x64xf32>
    %c0_12 = arith.constant 0 : index
    %c0_13 = arith.constant 0 : index
    %15 = vector.load %arg6[%c0_12, %c0_13] : memref<64x512xf32, #tpu.memory_space<vmem>>, vector<64x512xf32>
    %cst_14 = arith.constant dense<0.000000e+00> : vector<8x512xf32>
    %16 = tpu.matmul %14, %15, %cst_14 {dimension_numbers = #tpu.dot_dimension_numbers<[1], [0], [0], [1], [0, 0, 1, 1], [], []>} : vector<8x64xf32>, vector<64x512xf32>, vector<8x512xf32> -> vector<8x512xf32>
    %c0_15 = arith.constant 0 : index
    %c0_16 = arith.constant 0 : index
    %17 = vector.load %arg7[%c0_15, %c0_16] : memref<1x512xf32, #tpu.memory_space<vmem>>, vector<1x512xf32>
    %18 = vector.broadcast %17 : vector<1x512xf32> to vector<8x512xf32>
    %19 = arith.addf %16, %18 : vector<8x512xf32>
    %20 = vector.extract_strided_slice %19 {offsets = [0, 0], sizes = [8, 256], strides = [1, 1]} : vector<8x512xf32> to vector<8x256xf32>
    %21 = vector.extract_strided_slice %19 {offsets = [0, 256], sizes = [8, 256], strides = [1, 1]} : vector<8x512xf32> to vector<8x256xf32>
    %cst_17 = arith.constant 5.000000e-01 : f32
    %22 = vector.broadcast %cst_17 : f32 to vector<8x256xf32>
    %23 = arith.mulf %21, %22 : vector<8x256xf32>
    %24 = math.exp %23 : vector<8x256xf32>
    %c0_18 = arith.constant 0 : index
    %c0_19 = arith.constant 0 : index
    %25 = vector.load %arg8[%c0_18, %c0_19] : memref<256x256xf32, #tpu.memory_space<vmem>>, vector<256x256xf32>
    %cst_20 = arith.constant dense<0.000000e+00> : vector<8x256xf32>
    %26 = tpu.matmul %24, %25, %cst_20 {dimension_numbers = #tpu.dot_dimension_numbers<[1], [0], [0], [1], [0, 0, 1, 1], [], []>} : vector<8x256xf32>, vector<256x256xf32>, vector<8x256xf32> -> vector<8x256xf32>
    %27 = arith.addf %20, %26 : vector<8x256xf32>
    %28 = vector.extract_strided_slice %27 {offsets = [0, 0], sizes = [8, 128], strides = [1, 1]} : vector<8x256xf32> to vector<8x128xf32>
    %29 = vector.extract_strided_slice %27 {offsets = [0, 128], sizes = [8, 128], strides = [1, 1]} : vector<8x256xf32> to vector<8x128xf32>
    %c0_21 = arith.constant 0 : index
    %c0_22 = arith.constant 0 : index
    %30 = vector.load %arg22[%c0_21, %c0_22] : memref<8x256xf32, #tpu.memory_space<vmem>>, vector<8x256xf32>
    tpu.vector_store %arg22[%c0_21, %c0_22], %27 {strides = array<i32>} : memref<8x256xf32, #tpu.memory_space<vmem>>, vector<8x256xf32>,
    %c0_23 = arith.constant 0 : index
    %c0_24 = arith.constant 0 : index
    %31 = vector.load %arg9[%c0_23, %c0_24] : memref<128x64xf32, #tpu.memory_space<vmem>>, vector<128x64xf32>
    %cst_25 = arith.constant dense<0.000000e+00> : vector<8x64xf32>
    %32 = tpu.matmul %28, %31, %cst_25 {dimension_numbers = #tpu.dot_dimension_numbers<[1], [0], [0], [1], [0, 0, 1, 1], [], []>} : vector<8x128xf32>, vector<128x64xf32>, vector<8x64xf32> -> vector<8x64xf32>
    %c0_26 = arith.constant 0 : index
    %c0_27 = arith.constant 0 : index
    %33 = vector.load %arg10[%c0_26, %c0_27] : memref<1x64xf32, #tpu.memory_space<vmem>>, vector<1x64xf32>
    %34 = vector.broadcast %33 : vector<1x64xf32> to vector<8x64xf32>
    %35 = arith.addf %32, %34 : vector<8x64xf32>
    %cst_28 = arith.constant 0.000000e+00 : f32
    %36 = vector.broadcast %cst_28 : f32 to vector<8x64xf32>
    %37 = arith.maximumf %35, %36 : vector<8x64xf32>
    %c0_29 = arith.constant 0 : index
    %c0_30 = arith.constant 0 : index
    %38 = vector.load %arg11[%c0_29, %c0_30] : memref<64x32xf32, #tpu.memory_space<vmem>>, vector<64x32xf32>
    %cst_31 = arith.constant dense<0.000000e+00> : vector<8x32xf32>
    %39 = tpu.matmul %37, %38, %cst_31 {dimension_numbers = #tpu.dot_dimension_numbers<[1], [0], [0], [1], [0, 0, 1, 1], [], []>} : vector<8x64xf32>, vector<64x32xf32>, vector<8x32xf32> -> vector<8x32xf32>
    %c0_32 = arith.constant 0 : index
    %c0_33 = arith.constant 0 : index
    %40 = vector.load %arg12[%c0_32, %c0_33] : memref<1x32xf32, #tpu.memory_space<vmem>>, vector<1x32xf32>
    %41 = vector.broadcast %40 : vector<1x32xf32> to vector<8x32xf32>
    %42 = arith.addf %39, %41 : vector<8x32xf32>
    %cst_34 = arith.constant 0.000000e+00 : f32
    %43 = vector.broadcast %cst_34 : f32 to vector<8x32xf32>
    %44 = arith.maximumf %42, %43 : vector<8x32xf32>
    %c0_35 = arith.constant 0 : index
    %c0_36 = arith.constant 0 : index
    %45 = vector.load %arg17[%c0_35, %c0_36] : memref<32x128xf32, #tpu.memory_space<vmem>>, vector<32x128xf32>
    %cst_37 = arith.constant dense<0.000000e+00> : vector<8x128xf32>
    %46 = tpu.matmul %44, %45, %cst_37 {dimension_numbers = #tpu.dot_dimension_numbers<[1], [0], [0], [1], [0, 0, 1, 1], [], []>} : vector<8x32xf32>, vector<32x128xf32>, vector<8x128xf32> -> vector<8x128xf32>
    %c0_38 = arith.constant 0 : index
    %c0_39 = arith.constant 0 : index
    %47 = vector.load %arg18[%c0_38, %c0_39] : memref<1x128xf32, #tpu.memory_space<vmem>>, vector<1x128xf32>
    %48 = vector.broadcast %47 : vector<1x128xf32> to vector<8x128xf32>
    %49 = arith.addf %46, %48 : vector<8x128xf32>
    %c0_40 = arith.constant 0 : index
    %c0_41 = arith.constant 0 : index
    %50 = vector.load %arg13[%c0_40, %c0_41] : memref<128x64xf32, #tpu.memory_space<vmem>>, vector<128x64xf32>
    %cst_42 = arith.constant dense<0.000000e+00> : vector<8x64xf32>
    %51 = tpu.matmul %28, %50, %cst_42 {dimension_numbers = #tpu.dot_dimension_numbers<[1], [0], [0], [1], [0, 0, 1, 1], [], []>} : vector<8x128xf32>, vector<128x64xf32>, vector<8x64xf32> -> vector<8x64xf32>
    %c0_43 = arith.constant 0 : index
    %c0_44 = arith.constant 0 : index
    %52 = vector.load %arg14[%c0_43, %c0_44] : memref<1x64xf32, #tpu.memory_space<vmem>>, vector<1x64xf32>
    %53 = vector.broadcast %52 : vector<1x64xf32> to vector<8x64xf32>
    %54 = arith.addf %51, %53 : vector<8x64xf32>
    %cst_45 = arith.constant 0.000000e+00 : f32
    %55 = vector.broadcast %cst_45 : f32 to vector<8x64xf32>
    %56 = arith.maximumf %54, %55 : vector<8x64xf32>
    %c0_46 = arith.constant 0 : index
    %c0_47 = arith.constant 0 : index
    %57 = vector.load %arg13[%c0_46, %c0_47] : memref<128x64xf32, #tpu.memory_space<vmem>>, vector<128x64xf32>
    %cst_48 = arith.constant dense<0.000000e+00> : vector<8x64xf32>
    %58 = tpu.matmul %29, %57, %cst_48 {dimension_numbers = #tpu.dot_dimension_numbers<[1], [0], [0], [1], [0, 0, 1, 1], [], []>} : vector<8x128xf32>, vector<128x64xf32>, vector<8x64xf32> -> vector<8x64xf32>
    %c0_49 = arith.constant 0 : index
    %c0_50 = arith.constant 0 : index
    %59 = vector.load %arg14[%c0_49, %c0_50] : memref<1x64xf32, #tpu.memory_space<vmem>>, vector<1x64xf32>
    %60 = vector.broadcast %59 : vector<1x64xf32> to vector<8x64xf32>
    %61 = arith.addf %58, %60 : vector<8x64xf32>
    %cst_51 = arith.constant 0.000000e+00 : f32
    %62 = vector.broadcast %cst_51 : f32 to vector<8x64xf32>
    %63 = arith.maximumf %61, %62 : vector<8x64xf32>
    %c0_52 = arith.constant 0 : index
    %c0_53 = arith.constant 0 : index
    %64 = vector.load %arg15[%c0_52, %c0_53] : memref<64x32xf32, #tpu.memory_space<vmem>>, vector<64x32xf32>
    %cst_54 = arith.constant dense<0.000000e+00> : vector<8x32xf32>
    %65 = tpu.matmul %56, %64, %cst_54 {dimension_numbers = #tpu.dot_dimension_numbers<[1], [0], [0], [1], [0, 0, 1, 1], [], []>} : vector<8x64xf32>, vector<64x32xf32>, vector<8x32xf32> -> vector<8x32xf32>
    %c0_55 = arith.constant 0 : index
    %c0_56 = arith.constant 0 : index
    %66 = vector.load %arg16[%c0_55, %c0_56] : memref<1x32xf32, #tpu.memory_space<vmem>>, vector<1x32xf32>
    %67 = vector.broadcast %66 : vector<1x32xf32> to vector<8x32xf32>
    %68 = arith.addf %65, %67 : vector<8x32xf32>
    %cst_57 = arith.constant 0.000000e+00 : f32
    %69 = vector.broadcast %cst_57 : f32 to vector<8x32xf32>
    %70 = arith.maximumf %68, %69 : vector<8x32xf32>
    %c0_58 = arith.constant 0 : index
    %c0_59 = arith.constant 0 : index
    %71 = vector.load %arg15[%c0_58, %c0_59] : memref<64x32xf32, #tpu.memory_space<vmem>>, vector<64x32xf32>
    %cst_60 = arith.constant dense<0.000000e+00> : vector<8x32xf32>
    %72 = tpu.matmul %63, %71, %cst_60 {dimension_numbers = #tpu.dot_dimension_numbers<[1], [0], [0], [1], [0, 0, 1, 1], [], []>} : vector<8x64xf32>, vector<64x32xf32>, vector<8x32xf32> -> vector<8x32xf32>
    %c0_61 = arith.constant 0 : index
    %c0_62 = arith.constant 0 : index
    %73 = vector.load %arg16[%c0_61, %c0_62] : memref<1x32xf32, #tpu.memory_space<vmem>>, vector<1x32xf32>
    %74 = vector.broadcast %73 : vector<1x32xf32> to vector<8x32xf32>
    %75 = arith.addf %72, %74 : vector<8x32xf32>
    %cst_63 = arith.constant 0.000000e+00 : f32
    %76 = vector.broadcast %cst_63 : f32 to vector<8x32xf32>
    %77 = arith.maximumf %75, %76 : vector<8x32xf32>
    %c0_64 = arith.constant 0 : index
    %c0_65 = arith.constant 0 : index
    %78 = vector.load %arg19[%c0_64, %c0_65] : memref<32x128xf32, #tpu.memory_space<vmem>>, vector<32x128xf32>
    %cst_66 = arith.constant dense<0.000000e+00> : vector<8x128xf32>
    %79 = tpu.matmul %70, %78, %cst_66 {dimension_numbers = #tpu.dot_dimension_numbers<[1], [0], [0], [1], [0, 0, 1, 1], [], []>} : vector<8x32xf32>, vector<32x128xf32>, vector<8x128xf32> -> vector<8x128xf32>
    %c0_67 = arith.constant 0 : index
    %c0_68 = arith.constant 0 : index
    %80 = vector.load %arg20[%c0_67, %c0_68] : memref<1x128xf32, #tpu.memory_space<vmem>>, vector<1x128xf32>
    %81 = vector.broadcast %80 : vector<1x128xf32> to vector<8x128xf32>
    %82 = arith.addf %79, %81 : vector<8x128xf32>
    %c0_69 = arith.constant 0 : index
    %c0_70 = arith.constant 0 : index
    %83 = vector.load %arg19[%c0_69, %c0_70] : memref<32x128xf32, #tpu.memory_space<vmem>>, vector<32x128xf32>
    %cst_71 = arith.constant dense<0.000000e+00> : vector<8x128xf32>
    %84 = tpu.matmul %77, %83, %cst_71 {dimension_numbers = #tpu.dot_dimension_numbers<[1], [0], [0], [1], [0, 0, 1, 1], [], []>} : vector<8x32xf32>, vector<32x128xf32>, vector<8x128xf32> -> vector<8x128xf32>
    %c0_72 = arith.constant 0 : index
    %c0_73 = arith.constant 0 : index
    %85 = vector.load %arg20[%c0_72, %c0_73] : memref<1x128xf32, #tpu.memory_space<vmem>>, vector<1x128xf32>
    %86 = vector.broadcast %85 : vector<1x128xf32> to vector<8x128xf32>
    %87 = arith.addf %84, %86 : vector<8x128xf32>
    %c0_74 = arith.constant 0 : index
    %c0_75 = arith.constant 0 : index
    %88 = vector.load %arg21[%c0_74, %c0_75] : memref<8x512xf32, #tpu.memory_space<vmem>>, vector<8x512xf32>
    tpu.vector_store %arg21[%c0_74, %c0_75], %19 {strides = array<i32>} : memref<8x512xf32, #tpu.memory_space<vmem>>, vector<8x512xf32>,
    %c0_76 = arith.constant 0 : index
    %c0_77 = arith.constant 0 : index
    %89 = vector.load %arg23[%c0_76, %c0_77] : memref<8x384xf32, #tpu.memory_space<vmem>>, vector<8x128xf32>
    tpu.vector_store %arg23[%c0_76, %c0_77], %49 {strides = array<i32>} : memref<8x384xf32, #tpu.memory_space<vmem>>, vector<8x128xf32>,
    %c0_78 = arith.constant 0 : index
    %c128 = arith.constant 128 : index
    %90 = vector.load %arg23[%c0_78, %c128] : memref<8x384xf32, #tpu.memory_space<vmem>>, vector<8x128xf32>
    tpu.vector_store %arg23[%c0_78, %c128], %82 {strides = array<i32>} : memref<8x384xf32, #tpu.memory_space<vmem>>, vector<8x128xf32>,
    %c0_79 = arith.constant 0 : index
    %c256 = arith.constant 256 : index
    %91 = vector.load %arg23[%c0_79, %c256] : memref<8x384xf32, #tpu.memory_space<vmem>>, vector<8x128xf32>
    tpu.vector_store %arg23[%c0_79, %c256], %87 {strides = array<i32>} : memref<8x384xf32, #tpu.memory_space<vmem>>, vector<8x128xf32>,
    return
  }
  func.func @transform_0(%arg0: i32) -> (i32, i32) {
    %c0_i32 = arith.constant 0 : i32
    %c0_i32_0 = arith.constant 0 : i32
    return %arg0, %c0_i32 : i32, i32
  }
  func.func @transform_1(%arg0: i32) -> (i32, i32) {
    %c0_i32 = arith.constant 0 : i32
    %c0_i32_0 = arith.constant 0 : i32
    %c0_i32_1 = arith.constant 0 : i32
    return %c0_i32, %c0_i32_0 : i32, i32
  }
  func.func @transform_2(%arg0: i32) -> (i32, i32) {
    %c0_i32 = arith.constant 0 : i32
    %c0_i32_0 = arith.constant 0 : i32
    %c0_i32_1 = arith.constant 0 : i32
    return %c0_i32, %c0_i32_0 : i32, i32
  }
  func.func @transform_3(%arg0: i32) -> (i32, i32) {
    %c0_i32 = arith.constant 0 : i32
    %c0_i32_0 = arith.constant 0 : i32
    %c0_i32_1 = arith.constant 0 : i32
    return %c0_i32, %c0_i32_0 : i32, i32
  }
  func.func @transform_4(%arg0: i32) -> (i32, i32) {
    %c0_i32 = arith.constant 0 : i32
    %c0_i32_0 = arith.constant 0 : i32
    %c0_i32_1 = arith.constant 0 : i32
    return %c0_i32, %c0_i32_0 : i32, i32
  }
  func.func @transform_5(%arg0: i32) -> (i32, i32) {
    %c0_i32 = arith.constant 0 : i32
    %c0_i32_0 = arith.constant 0 : i32
    %c0_i32_1 = arith.constant 0 : i32
    return %c0_i32, %c0_i32_0 : i32, i32
  }
  func.func @transform_6(%arg0: i32) -> (i32, i32) {
    %c0_i32 = arith.constant 0 : i32
    %c0_i32_0 = arith.constant 0 : i32
    %c0_i32_1 = arith.constant 0 : i32
    return %c0_i32, %c0_i32_0 : i32, i32
  }
  func.func @transform_7(%arg0: i32) -> (i32, i32) {
    %c0_i32 = arith.constant 0 : i32
    %c0_i32_0 = arith.constant 0 : i32
    %c0_i32_1 = arith.constant 0 : i32
    return %c0_i32, %c0_i32_0 : i32, i32
  }
  func.func @transform_8(%arg0: i32) -> (i32, i32) {
    %c0_i32 = arith.constant 0 : i32
    %c0_i32_0 = arith.constant 0 : i32
    %c0_i32_1 = arith.constant 0 : i32
    return %c0_i32, %c0_i32_0 : i32, i32
  }
  func.func @transform_9(%arg0: i32) -> (i32, i32) {
    %c0_i32 = arith.constant 0 : i32
    %c0_i32_0 = arith.constant 0 : i32
    %c0_i32_1 = arith.constant 0 : i32
    return %c0_i32, %c0_i32_0 : i32, i32
  }
  func.func @transform_10(%arg0: i32) -> (i32, i32) {
    %c0_i32 = arith.constant 0 : i32
    %c0_i32_0 = arith.constant 0 : i32
    %c0_i32_1 = arith.constant 0 : i32
    return %c0_i32, %c0_i32_0 : i32, i32
  }
  func.func @transform_11(%arg0: i32) -> (i32, i32) {
    %c0_i32 = arith.constant 0 : i32
    %c0_i32_0 = arith.constant 0 : i32
    %c0_i32_1 = arith.constant 0 : i32
    return %c0_i32, %c0_i32_0 : i32, i32
  }
  func.func @transform_12(%arg0: i32) -> (i32, i32) {
    %c0_i32 = arith.constant 0 : i32
    %c0_i32_0 = arith.constant 0 : i32
    %c0_i32_1 = arith.constant 0 : i32
    return %c0_i32, %c0_i32_0 : i32, i32
  }
  func.func @transform_13(%arg0: i32) -> (i32, i32) {
    %c0_i32 = arith.constant 0 : i32
    %c0_i32_0 = arith.constant 0 : i32
    %c0_i32_1 = arith.constant 0 : i32
    return %c0_i32, %c0_i32_0 : i32, i32
  }
  func.func @transform_14(%arg0: i32) -> (i32, i32) {
    %c0_i32 = arith.constant 0 : i32
    %c0_i32_0 = arith.constant 0 : i32
    %c0_i32_1 = arith.constant 0 : i32
    return %c0_i32, %c0_i32_0 : i32, i32
  }
  func.func @transform_15(%arg0: i32) -> (i32, i32) {
    %c0_i32 = arith.constant 0 : i32
    %c0_i32_0 = arith.constant 0 : i32
    %c0_i32_1 = arith.constant 0 : i32
    return %c0_i32, %c0_i32_0 : i32, i32
  }
  func.func @transform_16(%arg0: i32) -> (i32, i32) {
    %c0_i32 = arith.constant 0 : i32
    %c0_i32_0 = arith.constant 0 : i32
    %c0_i32_1 = arith.constant 0 : i32
    return %c0_i32, %c0_i32_0 : i32, i32
  }
  func.func @transform_17(%arg0: i32) -> (i32, i32) {
    %c0_i32 = arith.constant 0 : i32
    %c0_i32_0 = arith.constant 0 : i32
    %c0_i32_1 = arith.constant 0 : i32
    return %c0_i32, %c0_i32_0 : i32, i32
  }
  func.func @transform_18(%arg0: i32) -> (i32, i32) {
    %c0_i32 = arith.constant 0 : i32
    %c0_i32_0 = arith.constant 0 : i32
    %c0_i32_1 = arith.constant 0 : i32
    return %c0_i32, %c0_i32_0 : i32, i32
  }
  func.func @transform_19(%arg0: i32) -> (i32, i32) {
    %c0_i32 = arith.constant 0 : i32
    %c0_i32_0 = arith.constant 0 : i32
    %c0_i32_1 = arith.constant 0 : i32
    return %c0_i32, %c0_i32_0 : i32, i32
  }
  func.func @transform_20(%arg0: i32) -> (i32, i32) {
    %c0_i32 = arith.constant 0 : i32
    %c0_i32_0 = arith.constant 0 : i32
    return %arg0, %c0_i32 : i32, i32
  }
  func.func @transform_21(%arg0: i32) -> (i32, i32) {
    %c0_i32 = arith.constant 0 : i32
    %c0_i32_0 = arith.constant 0 : i32
    return %arg0, %c0_i32 : i32, i32
  }
  func.func @transform_22(%arg0: i32) -> (i32, i32) {
    %c0_i32 = arith.constant 0 : i32
    %c0_i32_0 = arith.constant 0 : i32
    return %arg0, %c0_i32 : i32, i32
  }
}

</mosaic_0001>

<llo_original>
// kernel: odr_forward.1
$region0: #{odr_forward.1}
  #allocation0 [shape = 'u32[]', space=smem, size = 0x4, offset = 0x4, fixed_abs, tag = 'smem constant byte address 0x4 - core index']
  #allocation1 [shape = 'u32[144,128]{1,0:T(1,128)}', space=vmem, size = 0x12000, scoped, tag = 'internal scratch']
  %s0 = inlined_call_operand.vmem [shape: f32[16,16], index: 0, kind: input, shape index: {}]
  %s1 = inlined_call_operand.vmem [shape: f32[16,32], index: 1, kind: input, shape index: {}]
  %s2 = inlined_call_operand.vmem [shape: f32[1,32], index: 2, kind: input, shape index: {}]
  %s3 = inlined_call_operand.vmem [shape: f32[32,64], index: 3, kind: input, shape index: {}]
  %s4 = inlined_call_operand.vmem [shape: f32[1,64], index: 4, kind: input, shape index: {}]
  %s5 = inlined_call_operand.vmem [shape: f32[64,512], index: 5, kind: input, shape index: {}]
  %s6 = inlined_call_operand.vmem [shape: f32[1,512], index: 6, kind: input, shape index: {}]
  %s7 = inlined_call_operand.vmem [shape: f32[256,256], index: 7, kind: input, shape index: {}]
  %s8 = inlined_call_operand.vmem [shape: f32[128,64], index: 8, kind: input, shape index: {}]
  %s9 = inlined_call_operand.vmem [shape: f32[1,64], index: 9, kind: input, shape index: {}]
  %s10 = inlined_call_operand.vmem [shape: f32[64,32], index: 10, kind: input, shape index: {}]
  %s11 = inlined_call_operand.vmem [shape: f32[1,32], index: 11, kind: input, shape index: {}]
  %s12 = inlined_call_operand.vmem [shape: f32[128,64], index: 12, kind: input, shape index: {}]
  %s13 = inlined_call_operand.vmem [shape: f32[1,64], index: 13, kind: input, shape index: {}]
  %s14 = inlined_call_operand.vmem [shape: f32[64,32], index: 14, kind: input, shape index: {}]
  %s15 = inlined_call_operand.vmem [shape: f32[1,32], index: 15, kind: input, shape index: {}]
  %s16 = inlined_call_operand.vmem [shape: f32[32,128], index: 16, kind: input, shape index: {}]
  %s17 = inlined_call_operand.vmem [shape: f32[1,128], index: 17, kind: input, shape index: {}]
  %s18 = inlined_call_operand.vmem [shape: f32[32,128], index: 18, kind: input, shape index: {}]
  %s19 = inlined_call_operand.vmem [shape: f32[1,128], index: 19, kind: input, shape index: {}]
  %s20 = inlined_call_operand.vmem [shape: f32[16,512], index: 20, kind: output, shape index: {0}]
  %s21 = inlined_call_operand.vmem [shape: f32[16,256], index: 21, kind: output, shape index: {1}]
  %s22 = inlined_call_operand.vmem [shape: f32[16,384], index: 22, kind: output, shape index: {2}]
  %23 = xla_tuple %s20, %s21, %s22
  %s24 = sld [smem:[#allocation0]]
  $region129: #{odr_forward.1} parent=0
    _
  %s26 = ssub.s32 1, %s24
  %s27 = scalar_select 0, %s26, %s24
  loop: start=0, step=1, limit=4
  $region2: #{odr_forward.1} parent=0 // loop_pre_header
    _
  $region3: #{odr_forward.1} parent=0 // loop_header
    %s29 = sphi 0, %s33
    %p30 = scmp.ge.s32.totalorder %s29, 4
    %s39 = sphi 0, %s41
    %s42 = sphi 0, %s39
    %s43 = sphi 0, %s42
    %s59 = sphi 0, %s43
    %s63 = sphi 0, %s63
    %s65 = sphi 0, %s63
    %s66 = sphi 0, %s65
    %s80 = sphi 0, %s66
    %s84 = sphi 0, %s84
    %s86 = sphi 0, %s84
    %s87 = sphi 0, %s86
    %s101 = sphi 0, %s87
    %s105 = sphi 0, %s105
    %s107 = sphi 0, %s105
    %s108 = sphi 0, %s107
    %s122 = sphi 0, %s108
    %s126 = sphi 0, %s126
    %s128 = sphi 0, %s126
    %s129 = sphi 0, %s128
    %s143 = sphi 0, %s129
    %s147 = sphi 0, %s147
    %s149 = sphi 0, %s147
    %s150 = sphi 0, %s149
    %s164 = sphi 0, %s150
    %s168 = sphi 0, %s168
    %s170 = sphi 0, %s168
    %s171 = sphi 0, %s170
    %s185 = sphi 0, %s171
    %s189 = sphi 0, %s189
    %s191 = sphi 0, %s189
    %s192 = sphi 0, %s191
    %s206 = sphi 0, %s192
    %s210 = sphi 0, %s210
    %s212 = sphi 0, %s210
    %s213 = sphi 0, %s212
    %s227 = sphi 0, %s213
    %s231 = sphi 0, %s231
    %s233 = sphi 0, %s231
    %s234 = sphi 0, %s233
    %s248 = sphi 0, %s234
    %s252 = sphi 0, %s252
    %s254 = sphi 0, %s252
    %s255 = sphi 0, %s254
    %s269 = sphi 0, %s255
    %s273 = sphi 0, %s273
    %s275 = sphi 0, %s273
    %s276 = sphi 0, %s275
    %s290 = sphi 0, %s276
    %s294 = sphi 0, %s294
    %s296 = sphi 0, %s294
    %s297 = sphi 0, %s296
    %s311 = sphi 0, %s297
    %s315 = sphi 0, %s315
    %s317 = sphi 0, %s315
    %s318 = sphi 0, %s317
    %s332 = sphi 0, %s318
    %s336 = sphi 0, %s336
    %s338 = sphi 0, %s336
    %s339 = sphi 0, %s338
    %s353 = sphi 0, %s339
    %s357 = sphi 0, %s357
    %s359 = sphi 0, %s357
    %s360 = sphi 0, %s359
    %s374 = sphi 0, %s360
    %s378 = sphi 0, %s378
    %s380 = sphi 0, %s378
    %s381 = sphi 0, %s380
    %s395 = sphi 0, %s381
    %s399 = sphi 0, %s399
    %s401 = sphi 0, %s399
    %s402 = sphi 0, %s401
    %s416 = sphi 0, %s402
    %s420 = sphi 0, %s420
    %s422 = sphi 0, %s420
    %s423 = sphi 0, %s422
    %s437 = sphi 0, %s423
    %s441 = sphi 0, %s441
    %s443 = sphi 0, %s441
    %s444 = sphi 0, %s443
    %s458 = sphi 0, %s444
    %s464 = sphi 0, %s466
    %s467 = sphi 0, %s464
    %s468 = sphi 0, %s467
    %s484 = sphi 0, %s468
    %s490 = sphi 0, %s492
    %s493 = sphi 0, %s490
    %s494 = sphi 0, %s493
    %s510 = sphi 0, %s494
    %s516 = sphi 0, %s518
    %s519 = sphi 0, %s516
    %s520 = sphi 0, %s519
    %s536 = sphi 0, %s520
  $region4: #{odr_forward.1} parent=0 // loop_header_branch
    %32 = sbr.rel (%p30) target = $region8
  $region5: #{odr_forward.1} parent=0 // loop_body
    %s34 = ssub.s32 %s29, 1
    %s35 = ssub.s32 %s29, 2
    %s36 = sadd.s32 %s29, 1
    %s37 = ssub.s32 %s29, %s36
    %p38 = scmp.eq.s32.totalorder %s37, 0
    %s40 = sadd.s32 %s39, 1
    %s41 = scalar_select %p38, %s39, %s40
    %p44 = pneg %p38
    %p45 = scmp.eq.s32.totalorder %s29, 1
    %p46 = por %p44, %p45
    %p47 = scmp.ne.s32.totalorder %s39, %s42
    %p48 = scmp.eq.s32.totalorder %s29, 0
    %p49 = por %p47, %p48
    %p50 = scmp.ne.s32.totalorder %s39, %s42
    %p51 = scmp.eq.s32.totalorder %s34, 1
    %p52 = por %p50, %p51
    %p53 = scmp.ne.s32.totalorder %s42, %s43
    %p54 = scmp.eq.s32.totalorder %s34, 0
    %p55 = por %p53, %p54
    %p56 = scmp.ne.s32.totalorder %s42, %s43
    %p57 = scmp.eq.s32.totalorder %s35, 1
    %p58 = por %p56, %p57
    %p60 = scmp.ne.s32.totalorder %s43, %s59
    %p61 = scmp.eq.s32.totalorder %s35, 0
    %p62 = por %p60, %p61
    %s64 = sadd.s32 %s63, 1
    %p67 = scmp.eq.s32.totalorder %s29, 1
    %p68 = scmp.ne.s32.totalorder %s63, %s65
    %p69 = scmp.eq.s32.totalorder %s29, 0
    %p70 = por %p68, %p69
    %p71 = scmp.ne.s32.totalorder %s63, %s65
    %p72 = scmp.eq.s32.totalorder %s34, 1
    %p73 = por %p71, %p72
    %p74 = scmp.ne.s32.totalorder %s65, %s66
    %p75 = scmp.eq.s32.totalorder %s34, 0
    %p76 = por %p74, %p75
    %p77 = scmp.ne.s32.totalorder %s65, %s66
    %p78 = scmp.eq.s32.totalorder %s35, 1
    %p79 = por %p77, %p78
    %p81 = scmp.ne.s32.totalorder %s66, %s80
    %p82 = scmp.eq.s32.totalorder %s35, 0
    %p83 = por %p81, %p82
    %s85 = sadd.s32 %s84, 1
    %p88 = scmp.eq.s32.totalorder %s29, 1
    %p89 = scmp.ne.s32.totalorder %s84, %s86
    %p90 = scmp.eq.s32.totalorder %s29, 0
    %p91 = por %p89, %p90
    %p92 = scmp.ne.s32.totalorder %s84, %s86
    %p93 = scmp.eq.s32.totalorder %s34, 1
    %p94 = por %p92, %p93
    %p95 = scmp.ne.s32.totalorder %s86, %s87
    %p96 = scmp.eq.s32.totalorder %s34, 0
    %p97 = por %p95, %p96
    %p98 = scmp.ne.s32.totalorder %s86, %s87
    %p99 = scmp.eq.s32.totalorder %s35, 1
    %p100 = por %p98, %p99
    %p102 = scmp.ne.s32.totalorder %s87, %s101
    %p103 = scmp.eq.s32.totalorder %s35, 0
    %p104 = por %p102, %p103
    %s106 = sadd.s32 %s105, 1
    %p109 = scmp.eq.s32.totalorder %s29, 1
    %p110 = scmp.ne.s32.totalorder %s105, %s107
    %p111 = scmp.eq.s32.totalorder %s29, 0
    %p112 = por %p110, %p111
    %p113 = scmp.ne.s32.totalorder %s105, %s107
    %p114 = scmp.eq.s32.totalorder %s34, 1
    %p115 = por %p113, %p114
    %p116 = scmp.ne.s32.totalorder %s107, %s108
    %p117 = scmp.eq.s32.totalorder %s34, 0
    %p118 = por %p116, %p117
    %p119 = scmp.ne.s32.totalorder %s107, %s108
    %p120 = scmp.eq.s32.totalorder %s35, 1
    %p121 = por %p119, %p120
    %p123 = scmp.ne.s32.totalorder %s108, %s122
    %p124 = scmp.eq.s32.totalorder %s35, 0
    %p125 = por %p123, %p124
    %s127 = sadd.s32 %s126, 1
    %p130 = scmp.eq.s32.totalorder %s29, 1
    %p131 = scmp.ne.s32.totalorder %s126, %s128
    %p132 = scmp.eq.s32.totalorder %s29, 0
    %p133 = por %p131, %p132
    %p134 = scmp.ne.s32.totalorder %s126, %s128
    %p135 = scmp.eq.s32.totalorder %s34, 1
    %p136 = por %p134, %p135
    %p137 = scmp.ne.s32.totalorder %s128, %s129
    %p138 = scmp.eq.s32.totalorder %s34, 0
    %p139 = por %p137, %p138
    %p140 = scmp.ne.s32.totalorder %s128, %s129
    %p141 = scmp.eq.s32.totalorder %s35, 1
    %p142 = por %p140, %p141
    %p144 = scmp.ne.s32.totalorder %s129, %s143
    %p145 = scmp.eq.s32.totalorder %s35, 0
    %p146 = por %p144, %p145
    %s148 = sadd.s32 %s147, 1
    %p151 = scmp.eq.s32.totalorder %s29, 1
    %p152 = scmp.ne.s32.totalorder %s147, %s149
    %p153 = scmp.eq.s32.totalorder %s29, 0
    %p154 = por %p152, %p153
    %p155 = scmp.ne.s32.totalorder %s147, %s149
    %p156 = scmp.eq.s32.totalorder %s34, 1
    %p157 = por %p155, %p156
    %p158 = scmp.ne.s32.totalorder %s149, %s150
    %p159 = scmp.eq.s32.totalorder %s34, 0
    %p160 = por %p158, %p159
    %p161 = scmp.ne.s32.totalorder %s149, %s150
    %p162 = scmp.eq.s32.totalorder %s35, 1
    %p163 = por %p161, %p162
    %p165 = scmp.ne.s32.totalorder %s150, %s164
    %p166 = scmp.eq.s32.totalorder %s35, 0
    %p167 = por %p165, %p166
    %s169 = sadd.s32 %s168, 1
    %p172 = scmp.eq.s32.totalorder %s29, 1
    %p173 = scmp.ne.s32.totalorder %s168, %s170
    %p174 = scmp.eq.s32.totalorder %s29, 0
    %p175 = por %p173, %p174
    %p176 = scmp.ne.s32.totalorder %s168, %s170
    %p177 = scmp.eq.s32.totalorder %s34, 1
    %p178 = por %p176, %p177
    %p179 = scmp.ne.s32.totalorder %s170, %s171
    %p180 = scmp.eq.s32.totalorder %s34, 0
    %p181 = por %p179, %p180
    %p182 = scmp.ne.s32.totalorder %s170, %s171
    %p183 = scmp.eq.s32.totalorder %s35, 1
    %p184 = por %p182, %p183
    %p186 = scmp.ne.s32.totalorder %s171, %s185
    %p187 = scmp.eq.s32.totalorder %s35, 0
    %p188 = por %p186, %p187
    %s190 = sadd.s32 %s189, 1
    %p193 = scmp.eq.s32.totalorder %s29, 1
    %p194 = scmp.ne.s32.totalorder %s189, %s191
    %p195 = scmp.eq.s32.totalorder %s29, 0
    %p196 = por %p194, %p195
    %p197 = scmp.ne.s32.totalorder %s189, %s191
    %p198 = scmp.eq.s32.totalorder %s34, 1
    %p199 = por %p197, %p198
    %p200 = scmp.ne.s32.totalorder %s191, %s192
    %p201 = scmp.eq.s32.totalorder %s34, 0
    %p202 = por %p200, %p201
    %p203 = scmp.ne.s32.totalorder %s191, %s192
    %p204 = scmp.eq.s32.totalorder %s35, 1
    %p205 = por %p203, %p204
    %p207 = scmp.ne.s32.totalorder %s192, %s206
    %p208 = scmp.eq.s32.totalorder %s35, 0
    %p209 = por %p207, %p208
    %s211 = sadd.s32 %s210, 1
    %p214 = scmp.eq.s32.totalorder %s29, 1
    %p215 = scmp.ne.s32.totalorder %s210, %s212
    %p216 = scmp.eq.s32.totalorder %s29, 0
    %p217 = por %p215, %p216
    %p218 = scmp.ne.s32.totalorder %s210, %s212
    %p219 = scmp.eq.s32.totalorder %s34, 1
    %p220 = por %p218, %p219
    %p221 = scmp.ne.s32.totalorder %s212, %s213
    %p222 = scmp.eq.s32.totalorder %s34, 0
    %p223 = por %p221, %p222
    %p224 = scmp.ne.s32.totalorder %s212, %s213
    %p225 = scmp.eq.s32.totalorder %s35, 1
    %p226 = por %p224, %p225
    %p228 = scmp.ne.s32.totalorder %s213, %s227
    %p229 = scmp.eq.s32.totalorder %s35, 0
    %p230 = por %p228, %p229
    %s232 = sadd.s32 %s231, 1
    %p235 = scmp.eq.s32.totalorder %s29, 1
    %p236 = scmp.ne.s32.totalorder %s231, %s233
    %p237 = scmp.eq.s32.totalorder %s29, 0
    %p238 = por %p236, %p237
    %p239 = scmp.ne.s32.totalorder %s231, %s233
    %p240 = scmp.eq.s32.totalorder %s34, 1
    %p241 = por %p239, %p240
    %p242 = scmp.ne.s32.totalorder %s233, %s234
    %p243 = scmp.eq.s32.totalorder %s34, 0
    %p244 = por %p242, %p243
    %p245 = scmp.ne.s32.totalorder %s233, %s234
    %p246 = scmp.eq.s32.totalorder %s35, 1
    %p247 = por %p245, %p246
    %p249 = scmp.ne.s32.totalorder %s234, %s248
    %p250 = scmp.eq.s32.totalorder %s35, 0
    %p251 = por %p249, %p250
    %s253 = sadd.s32 %s252, 1
    %p256 = scmp.eq.s32.totalorder %s29, 1
    %p257 = scmp.ne.s32.totalorder %s252, %s254
    %p258 = scmp.eq.s32.totalorder %s29, 0
    %p259 = por %p257, %p258
    %p260 = scmp.ne.s32.totalorder %s252, %s254
    %p261 = scmp.eq.s32.totalorder %s34, 1
    %p262 = por %p260, %p261
    %p263 = scmp.ne.s32.totalorder %s254, %s255
    %p264 = scmp.eq.s32.totalorder %s34, 0
    %p265 = por %p263, %p264
    %p266 = scmp.ne.s32.totalorder %s254, %s255
    %p267 = scmp.eq.s32.totalorder %s35, 1
    %p268 = por %p266, %p267
    %p270 = scmp.ne.s32.totalorder %s255, %s269
    %p271 = scmp.eq.s32.totalorder %s35, 0
    %p272 = por %p270, %p271
    %s274 = sadd.s32 %s273, 1
    %p277 = scmp.eq.s32.totalorder %s29, 1
    %p278 = scmp.ne.s32.totalorder %s273, %s275
    %p279 = scmp.eq.s32.totalorder %s29, 0
    %p280 = por %p278, %p279
    %p281 = scmp.ne.s32.totalorder %s273, %s275
    %p282 = scmp.eq.s32.totalorder %s34, 1
    %p283 = por %p281, %p282
    %p284 = scmp.ne.s32.totalorder %s275, %s276
    %p285 = scmp.eq.s32.totalorder %s34, 0
    %p286 = por %p284, %p285
    %p287 = scmp.ne.s32.totalorder %s275, %s276
    %p288 = scmp.eq.s32.totalorder %s35, 1
    %p289 = por %p287, %p288
    %p291 = scmp.ne.s32.totalorder %s276, %s290
    %p292 = scmp.eq.s32.totalorder %s35, 0
    %p293 = por %p291, %p292
    %s295 = sadd.s32 %s294, 1
    %p298 = scmp.eq.s32.totalorder %s29, 1
    %p299 = scmp.ne.s32.totalorder %s294, %s296
    %p300 = scmp.eq.s32.totalorder %s29, 0
    %p301 = por %p299, %p300
    %p302 = scmp.ne.s32.totalorder %s294, %s296
    %p303 = scmp.eq.s32.totalorder %s34, 1
    %p304 = por %p302, %p303
    %p305 = scmp.ne.s32.totalorder %s296, %s297
    %p306 = scmp.eq.s32.totalorder %s34, 0
    %p307 = por %p305, %p306
    %p308 = scmp.ne.s32.totalorder %s296, %s297
    %p309 = scmp.eq.s32.totalorder %s35, 1
    %p310 = por %p308, %p309
    %p312 = scmp.ne.s32.totalorder %s297, %s311
    %p313 = scmp.eq.s32.totalorder %s35, 0
    %p314 = por %p312, %p313
    %s316 = sadd.s32 %s315, 1
    %p319 = scmp.eq.s32.totalorder %s29, 1
    %p320 = scmp.ne.s32.totalorder %s315, %s317
    %p321 = scmp.eq.s32.totalorder %s29, 0
    %p322 = por %p320, %p321
    %p323 = scmp.ne.s32.totalorder %s315, %s317
    %p324 = scmp.eq.s32.totalorder %s34, 1
    %p325 = por %p323, %p324
    %p326 = scmp.ne.s32.totalorder %s317, %s318
    %p327 = scmp.eq.s32.totalorder %s34, 0
    %p328 = por %p326, %p327
    %p329 = scmp.ne.s32.totalorder %s317, %s318
    %p330 = scmp.eq.s32.totalorder %s35, 1
    %p331 = por %p329, %p330
    %p333 = scmp.ne.s32.totalorder %s318, %s332
    %p334 = scmp.eq.s32.totalorder %s35, 0
    %p335 = por %p333, %p334
    %s337 = sadd.s32 %s336, 1
    %p340 = scmp.eq.s32.totalorder %s29, 1
    %p341 = scmp.ne.s32.totalorder %s336, %s338
    %p342 = scmp.eq.s32.totalorder %s29, 0
    %p343 = por %p341, %p342
    %p344 = scmp.ne.s32.totalorder %s336, %s338
    %p345 = scmp.eq.s32.totalorder %s34, 1
    %p346 = por %p344, %p345
    %p347 = scmp.ne.s32.totalorder %s338, %s339
    %p348 = scmp.eq.s32.totalorder %s34, 0
    %p349 = por %p347, %p348
    %p350 = scmp.ne.s32.totalorder %s338, %s339
    %p351 = scmp.eq.s32.totalorder %s35, 1
    %p352 = por %p350, %p351
    %p354 = scmp.ne.s32.totalorder %s339, %s353
    %p355 = scmp.eq.s32.totalorder %s35, 0
    %p356 = por %p354, %p355
    %s358 = sadd.s32 %s357, 1
    %p361 = scmp.eq.s32.totalorder %s29, 1
    %p362 = scmp.ne.s32.totalorder %s357, %s359
    %p363 = scmp.eq.s32.totalorder %s29, 0
    %p364 = por %p362, %p363
    %p365 = scmp.ne.s32.totalorder %s357, %s359
    %p366 = scmp.eq.s32.totalorder %s34, 1
    %p367 = por %p365, %p366
    %p368 = scmp.ne.s32.totalorder %s359, %s360
    %p369 = scmp.eq.s32.totalorder %s34, 0
    %p370 = por %p368, %p369
    %p371 = scmp.ne.s32.totalorder %s359, %s360
    %p372 = scmp.eq.s32.totalorder %s35, 1
    %p373 = por %p371, %p372
    %p375 = scmp.ne.s32.totalorder %s360, %s374
    %p376 = scmp.eq.s32.totalorder %s35, 0
    %p377 = por %p375, %p376
    %s379 = sadd.s32 %s378, 1
    %p382 = scmp.eq.s32.totalorder %s29, 1
    %p383 = scmp.ne.s32.totalorder %s378, %s380
    %p384 = scmp.eq.s32.totalorder %s29, 0
    %p385 = por %p383, %p384
    %p386 = scmp.ne.s32.totalorder %s378, %s380
    %p387 = scmp.eq.s32.totalorder %s34, 1
    %p388 = por %p386, %p387
    %p389 = scmp.ne.s32.totalorder %s380, %s381
    %p390 = scmp.eq.s32.totalorder %s34, 0
    %p391 = por %p389, %p390
    %p392 = scmp.ne.s32.totalorder %s380, %s381
    %p393 = scmp.eq.s32.totalorder %s35, 1
    %p394 = por %p392, %p393
    %p396 = scmp.ne.s32.totalorder %s381, %s395
    %p397 = scmp.eq.s32.totalorder %s35, 0
    %p398 = por %p396, %p397
    %s400 = sadd.s32 %s399, 1
    %p403 = scmp.eq.s32.totalorder %s29, 1
    %p404 = scmp.ne.s32.totalorder %s399, %s401
    %p405 = scmp.eq.s32.totalorder %s29, 0
    %p406 = por %p404, %p405
    %p407 = scmp.ne.s32.totalorder %s399, %s401
    %p408 = scmp.eq.s32.totalorder %s34, 1
    %p409 = por %p407, %p408
    %p410 = scmp.ne.s32.totalorder %s401, %s402
    %p411 = scmp.eq.s32.totalorder %s34, 0
    %p412 = por %p410, %p411
    %p413 = scmp.ne.s32.totalorder %s401, %s402
    %p414 = scmp.eq.s32.totalorder %s35, 1
    %p415 = por %p413, %p414
    %p417 = scmp.ne.s32.totalorder %s402, %s416
    %p418 = scmp.eq.s32.totalorder %s35, 0
    %p419 = por %p417, %p418
    %s421 = sadd.s32 %s420, 1
    %p424 = scmp.eq.s32.totalorder %s29, 1
    %p425 = scmp.ne.s32.totalorder %s420, %s422
    %p426 = scmp.eq.s32.totalorder %s29, 0
    %p427 = por %p425, %p426
    %p428 = scmp.ne.s32.totalorder %s420, %s422
    %p429 = scmp.eq.s32.totalorder %s34, 1
    %p430 = por %p428, %p429
    %p431 = scmp.ne.s32.totalorder %s422, %s423
    %p432 = scmp.eq.s32.totalorder %s34, 0
    %p433 = por %p431, %p432
    %p434 = scmp.ne.s32.totalorder %s422, %s423
    %p435 = scmp.eq.s32.totalorder %s35, 1
    %p436 = por %p434, %p435
    %p438 = scmp.ne.s32.totalorder %s423, %s437
    %p439 = scmp.eq.s32.totalorder %s35, 0
    %p440 = por %p438, %p439
    %s442 = sadd.s32 %s441, 1
    %p445 = scmp.eq.s32.totalorder %s29, 1
    %p446 = scmp.ne.s32.totalorder %s441, %s443
    %p447 = scmp.eq.s32.totalorder %s29, 0
    %p448 = por %p446, %p447
    %p449 = scmp.ne.s32.totalorder %s441, %s443
    %p450 = scmp.eq.s32.totalorder %s34, 1
    %p451 = por %p449, %p450
    %p452 = scmp.ne.s32.totalorder %s443, %s444
    %p453 = scmp.eq.s32.totalorder %s34, 0
    %p454 = por %p452, %p453
    %p455 = scmp.ne.s32.totalorder %s443, %s444
    %p456 = scmp.eq.s32.totalorder %s35, 1
    %p457 = por %p455, %p456
    %p459 = scmp.ne.s32.totalorder %s444, %s458
    %p460 = scmp.eq.s32.totalorder %s35, 0
    %p461 = por %p459, %p460
    %s462 = ssub.s32 %s29, %s36
    %p463 = scmp.eq.s32.totalorder %s462, 0
    %s465 = sadd.s32 %s464, 1
    %s466 = scalar_select %p463, %s464, %s465
    %p469 = pneg %p463
    %p470 = scmp.eq.s32.totalorder %s29, 1
    %p471 = por %p469, %p470
    %p472 = scmp.ne.s32.totalorder %s464, %s467
    %p473 = scmp.eq.s32.totalorder %s29, 0
    %p474 = por %p472, %p473
    %p475 = scmp.ne.s32.totalorder %s464, %s467
    %p476 = scmp.eq.s32.totalorder %s34, 1
    %p477 = por %p475, %p476
    %p478 = scmp.ne.s32.totalorder %s467, %s468
    %p479 = scmp.eq.s32.totalorder %s34, 0
    %p480 = por %p478, %p479
    %p481 = scmp.ne.s32.totalorder %s467, %s468
    %p482 = scmp.eq.s32.totalorder %s35, 1
    %p483 = por %p481, %p482
    %p485 = scmp.ne.s32.totalorder %s468, %s484
    %p486 = scmp.eq.s32.totalorder %s35, 0
    %p487 = por %p485, %p486
    %s488 = ssub.s32 %s29, %s36
    %p489 = scmp.eq.s32.totalorder %s488, 0
    %s491 = sadd.s32 %s490, 1
    %s492 = scalar_select %p489, %s490, %s491
    %p495 = pneg %p489
    %p496 = scmp.eq.s32.totalorder %s29, 1
    %p497 = por %p495, %p496
    %p498 = scmp.ne.s32.totalorder %s490, %s493
    %p499 = scmp.eq.s32.totalorder %s29, 0
    %p500 = por %p498, %p499
    %p501 = scmp.ne.s32.totalorder %s490, %s493
    %p502 = scmp.eq.s32.totalorder %s34, 1
    %p503 = por %p501, %p502
    %p504 = scmp.ne.s32.totalorder %s493, %s494
    %p505 = scmp.eq.s32.totalorder %s34, 0
    %p506 = por %p504, %p505
    %p507 = scmp.ne.s32.totalorder %s493, %s494
    %p508 = scmp.eq.s32.totalorder %s35, 1
    %p509 = por %p507, %p508
    %p511 = scmp.ne.s32.totalorder %s494, %s510
    %p512 = scmp.eq.s32.totalorder %s35, 0
    %p513 = por %p511, %p512
    %s514 = ssub.s32 %s29, %s36
    %p515 = scmp.eq.s32.totalorder %s514, 0
    %s517 = sadd.s32 %s516, 1
    %s518 = scalar_select %p515, %s516, %s517
    %p521 = pneg %p515
    %p522 = scmp.eq.s32.totalorder %s29, 1
    %p523 = por %p521, %p522
    %p524 = scmp.ne.s32.totalorder %s516, %s519
    %p525 = scmp.eq.s32.totalorder %s29, 0
    %p526 = por %p524, %p525
    %p527 = scmp.ne.s32.totalorder %s516, %s519
    %p528 = scmp.eq.s32.totalorder %s34, 1
    %p529 = por %p527, %p528
    %p530 = scmp.ne.s32.totalorder %s519, %s520
    %p531 = scmp.eq.s32.totalorder %s34, 0
    %p532 = por %p530, %p531
    %p533 = scmp.ne.s32.totalorder %s519, %s520
    %p534 = scmp.eq.s32.totalorder %s35, 1
    %p535 = por %p533, %p534
    %p537 = scmp.ne.s32.totalorder %s520, %s536
    %p538 = scmp.eq.s32.totalorder %s35, 0
    %p539 = por %p537, %p538
    %p540 = scmp.le.s32.totalorder 1, %s29
    %p541 = scmp.lt.s32.totalorder %s29, 3
    %p542 = pnand %p540, %p541
    %p543 = pneg %p542
    // Predicated region
    $region9: #{odr_forward.1} parent=5 // pred_check
      _
    $region10: #{odr_forward.1} parent=5 // pred_check_branch
      %545 = sbr.rel (%p542) target = $region12
    $region11: #{odr_forward.1} parent=5 // pred_region
      %s546 = ssub.s32 %s29, 1
      // Predicated region
      $region13: #{odr_forward.1} parent=11 // pred_check
        %p547 = pneg %p76
      $region14: #{odr_forward.1} parent=11 // pred_check_branch
        %549 = sbr.rel (%p547) target = $region16
      $region15: #{odr_forward.1} parent=11 // pred_region
        _
      $region16: #{odr_forward.1} parent=11 // pred_fallthru
        _
      // Predicated region
      $region17: #{odr_forward.1} parent=11 // pred_check
        %p550 = pneg %p97
      $region18: #{odr_forward.1} parent=11 // pred_check_branch
        %552 = sbr.rel (%p550) target = $region20
      $region19: #{odr_forward.1} parent=11 // pred_region
        _
      $region20: #{odr_forward.1} parent=11 // pred_fallthru
        _
      // Predicated region
      $region21: #{odr_forward.1} parent=11 // pred_check
        %p553 = pneg %p118
      $region22: #{odr_forward.1} parent=11 // pred_check_branch
        %555 = sbr.rel (%p553) target = $region24
      $region23: #{odr_forward.1} parent=11 // pred_region
        _
      $region24: #{odr_forward.1} parent=11 // pred_fallthru
        _
      // Predicated region
      $region25: #{odr_forward.1} parent=11 // pred_check
        %p556 = pneg %p139
      $region26: #{odr_forward.1} parent=11 // pred_check_branch
        %558 = sbr.rel (%p556) target = $region28
      $region27: #{odr_forward.1} parent=11 // pred_region
        _
      $region28: #{odr_forward.1} parent=11 // pred_fallthru
        _
      // Predicated region
      $region29: #{odr_forward.1} parent=11 // pred_check
        %p559 = pneg %p160
      $region30: #{odr_forward.1} parent=11 // pred_check_branch
        %561 = sbr.rel (%p559) target = $region32
      $region31: #{odr_forward.1} parent=11 // pred_region
        _
      $region32: #{odr_forward.1} parent=11 // pred_fallthru
        _
      // Predicated region
      $region33: #{odr_forward.1} parent=11 // pred_check
        %p562 = pneg %p181
      $region34: #{odr_forward.1} parent=11 // pred_check_branch
        %564 = sbr.rel (%p562) target = $region36
      $region35: #{odr_forward.1} parent=11 // pred_region
        _
      $region36: #{odr_forward.1} parent=11 // pred_fallthru
        _
      // Predicated region
      $region37: #{odr_forward.1} parent=11 // pred_check
        %p565 = pneg %p202
      $region38: #{odr_forward.1} parent=11 // pred_check_branch
        %567 = sbr.rel (%p565) target = $region40
      $region39: #{odr_forward.1} parent=11 // pred_region
        _
      $region40: #{odr_forward.1} parent=11 // pred_fallthru
        _
      // Predicated region
      $region41: #{odr_forward.1} parent=11 // pred_check
        %p568 = pneg %p223
      $region42: #{odr_forward.1} parent=11 // pred_check_branch
        %570 = sbr.rel (%p568) target = $region44
      $region43: #{odr_forward.1} parent=11 // pred_region
        _
      $region44: #{odr_forward.1} parent=11 // pred_fallthru
        _
      // Predicated region
      $region45: #{odr_forward.1} parent=11 // pred_check
        %p571 = pneg %p244
      $region46: #{odr_forward.1} parent=11 // pred_check_branch
        %573 = sbr.rel (%p571) target = $region48
      $region47: #{odr_forward.1} parent=11 // pred_region
        _
      $region48: #{odr_forward.1} parent=11 // pred_fallthru
        _
      // Predicated region
      $region49: #{odr_forward.1} parent=11 // pred_check
        %p574 = pneg %p265
      $region50: #{odr_forward.1} parent=11 // pred_check_branch
        %576 = sbr.rel (%p574) target = $region52
      $region51: #{odr_forward.1} parent=11 // pred_region
        _
      $region52: #{odr_forward.1} parent=11 // pred_fallthru
        _
      // Predicated region
      $region53: #{odr_forward.1} parent=11 // pred_check
        %p577 = pneg %p286
      $region54: #{odr_forward.1} parent=11 // pred_check_branch
        %579 = sbr.rel (%p577) target = $region56
      $region55: #{odr_forward.1} parent=11 // pred_region
        _
      $region56: #{odr_forward.1} parent=11 // pred_fallthru
        _
      // Predicated region
      $region57: #{odr_forward.1} parent=11 // pred_check
        %p580 = pneg %p307
      $region58: #{odr_forward.1} parent=11 // pred_check_branch
        %582 = sbr.rel (%p580) target = $region60
      $region59: #{odr_forward.1} parent=11 // pred_region
        _
      $region60: #{odr_forward.1} parent=11 // pred_fallthru
        _
      // Predicated region
      $region61: #{odr_forward.1} parent=11 // pred_check
        %p583 = pneg %p328
      $region62: #{odr_forward.1} parent=11 // pred_check_branch
        %585 = sbr.rel (%p583) target = $region64
      $region63: #{odr_forward.1} parent=11 // pred_region
        _
      $region64: #{odr_forward.1} parent=11 // pred_fallthru
        _
      // Predicated region
      $region65: #{odr_forward.1} parent=11 // pred_check
        %p586 = pneg %p349
      $region66: #{odr_forward.1} parent=11 // pred_check_branch
        %588 = sbr.rel (%p586) target = $region68
      $region67: #{odr_forward.1} parent=11 // pred_region
        _
      $region68: #{odr_forward.1} parent=11 // pred_fallthru
        _
      // Predicated region
      $region69: #{odr_forward.1} parent=11 // pred_check
        %p589 = pneg %p370
      $region70: #{odr_forward.1} parent=11 // pred_check_branch
        %591 = sbr.rel (%p589) target = $region72
      $region71: #{odr_forward.1} parent=11 // pred_region
        _
      $region72: #{odr_forward.1} parent=11 // pred_fallthru
        _
      // Predicated region
      $region73: #{odr_forward.1} parent=11 // pred_check
        %p592 = pneg %p391
      $region74: #{odr_forward.1} parent=11 // pred_check_branch
        %594 = sbr.rel (%p592) target = $region76
      $region75: #{odr_forward.1} parent=11 // pred_region
        _
      $region76: #{odr_forward.1} parent=11 // pred_fallthru
        _
      // Predicated region
      $region77: #{odr_forward.1} parent=11 // pred_check
        %p595 = pneg %p412
      $region78: #{odr_forward.1} parent=11 // pred_check_branch
        %597 = sbr.rel (%p595) target = $region80
      $region79: #{odr_forward.1} parent=11 // pred_region
        _
      $region80: #{odr_forward.1} parent=11 // pred_fallthru
        _
      // Predicated region
      $region81: #{odr_forward.1} parent=11 // pred_check
        %p598 = pneg %p433
      $region82: #{odr_forward.1} parent=11 // pred_check_branch
        %600 = sbr.rel (%p598) target = $region84
      $region83: #{odr_forward.1} parent=11 // pred_region
        _
      $region84: #{odr_forward.1} parent=11 // pred_fallthru
        _
      // Predicated region
      $region85: #{odr_forward.1} parent=11 // pred_check
        %p601 = pneg %p454
      $region86: #{odr_forward.1} parent=11 // pred_check_branch
        %603 = sbr.rel (%p601) target = $region88
      $region87: #{odr_forward.1} parent=11 // pred_region
        _
      $region88: #{odr_forward.1} parent=11 // pred_fallthru
        _
    $region12: #{odr_forward.1} parent=5 // pred_fallthru
      _
    %p604 = scmp.lt.s32.totalorder %s29, 2
    // Predicated region
    $region89: #{odr_forward.1} parent=5 // pred_check
      %p605 = pneg %p604
    $region90: #{odr_forward.1} parent=5 // pred_check_branch
      %607 = sbr.rel (%p605) target = $region92
    $region91: #{odr_forward.1} parent=5 // pred_region
      // Predicated region
      $region93: #{odr_forward.1} parent=91 // pred_check
        %p608 = pneg %p49
      $region94: #{odr_forward.1} parent=91 // pred_check_branch
        %610 = sbr.rel (%p608) target = $region96
      $region95: #{odr_forward.1} parent=91 // pred_region
        %p611 = scmp.lt.s32.totalorder %s29, 1
        %s612 = scalar_select %p611, %s29, 1
        %s613 = smul.addr %s612, 8
        %s614 = scalar_lea.vmem %s0, %s613
      $region96: #{odr_forward.1} parent=91 // pred_fallthru
        _
    $region92: #{odr_forward.1} parent=5 // pred_fallthru
      _
    %p615 = scmp.le.s32.totalorder 1, %s29
    %p616 = scmp.lt.s32.totalorder %s29, 3
    %p617 = pnand %p615, %p616
    %p618 = pneg %p617
    // Predicated region
    $region97: #{odr_forward.1} parent=5 // pred_check
      _
    $region98: #{odr_forward.1} parent=5 // pred_check_branch
      %620 = sbr.rel (%p617) target = $region100
    $region99: #{odr_forward.1} parent=5 // pred_region
      %s621 = ssub.s32 %s29, 1
      %p622 = scmp.lt.s32.totalorder %s34, 1
      %s623 = scalar_select %p622, %s34, 1
      %s624 = smul.addr %s623, 8
      %s625 = scalar_lea.vmem %s0, %s624
      %p626 = pneg %p55
      %p627 = pneg %p52
      %p628 = pneg %p76
      %p629 = pneg %p73
      %p630 = pneg %p97
      %p631 = pneg %p94
      %p632 = pneg %p118
      %p633 = pneg %p115
      %p634 = pneg %p139
      %p635 = pneg %p136
      %p636 = pneg %p160
      %p637 = pneg %p157
      %p638 = pneg %p181
      %p639 = pneg %p178
      %p640 = pneg %p202
      %p641 = pneg %p199
      %p642 = pneg %p223
      %p643 = pneg %p220
      %p644 = pneg %p244
      %p645 = pneg %p241
      %p646 = pneg %p265
      %p647 = pneg %p262
      %p648 = pneg %p286
      %p649 = pneg %p283
      %p650 = pneg %p307
      %p651 = pneg %p304
      %p652 = pneg %p328
      %p653 = pneg %p325
      %p654 = pneg %p349
      %p655 = pneg %p346
      %p656 = pneg %p370
      %p657 = pneg %p367
      %p658 = pneg %p391
      %p659 = pneg %p388
      %p660 = pneg %p412
      %p661 = pneg %p409
      %p662 = pneg %p433
      %p663 = pneg %p430
      %p664 = pneg %p454
      %p665 = pneg %p451
      %p666 = pneg %p480
      %p667 = pneg %p477
      %p668 = scmp.lt.s32.totalorder %s34, 1
      %s669 = scalar_select %p668, %s34, 1
      %s670 = smul.addr %s669, 4
      %s671 = smul.addr %s670, 8
      %s672 = scalar_lea.vmem %s20, %s671
      %p673 = pneg %p506
      %p674 = pneg %p503
      %p675 = scmp.lt.s32.totalorder %s34, 1
      %s676 = scalar_select %p675, %s34, 1
      %s677 = smul.addr %s676, 2
      %s678 = smul.addr %s677, 8
      %s679 = scalar_lea.vmem %s21, %s678
      %p680 = pneg %p532
      %p681 = pneg %p529
      %p682 = scmp.lt.s32.totalorder %s34, 1
      %s683 = scalar_select %p682, %s34, 1
      %s684 = smul.addr %s683, 3
      %s685 = smul.addr %s684, 8
      %s686 = scalar_lea.vmem %s22, %s685
      %p687 = scmp.lt.s32.totalorder %s34, 1
      %s688 = scalar_select %p687, %s34, 1
      %s689 = smul.addr %s688, 8
      %s690 = scalar_lea.vmem %s0, %s689
      %p691 = scmp.lt.s32.totalorder %s34, 1
      %s692 = scalar_select %p691, %s34, 1
      %s693 = smul.addr %s692, 4
      %s694 = smul.addr %s693, 8
      %s695 = scalar_lea.vmem %s20, %s694
      %p696 = scmp.lt.s32.totalorder %s34, 1
      %s697 = scalar_select %p696, %s34, 1
      %s698 = smul.addr %s697, 2
      %s699 = smul.addr %s698, 8
      %s700 = scalar_lea.vmem %s21, %s699
      %p701 = scmp.lt.s32.totalorder %s34, 1
      %s702 = scalar_select %p701, %s34, 1
      %s703 = smul.addr %s702, 3
      %s704 = smul.addr %s703, 8
      %s705 = scalar_lea.vmem %s22, %s704
      %v706 = vld [vmem:[%s690] sm:$0xff]
      %v707 = vld [vmem:[%s1] sm:$0xff]
      %v708 = vld [vmem:[%s1 + $0x8] sm:$0xff]
      %v709 = vld [vmem:[%s2] sm:$0x1]
      %v711 = vlaneseq
      %v712 = vshrl.u32 %v711, 7
      %v713 = vsub.s32 0, %v712
      %v714 = vrot.slane %v709, %v713
      %vm716 = vcmask 130048
      %v718 = vsel %vm716, %v706, 0
      %720 = vmatprep.subr.mxu0 0.0
      %721 = vmatpush1.msra.mxu0 %v707
      %722 = vmatprep.subr.mxu0 0.0
      %723 = vmatpush1.msra.mxu0 %v708
      %724 = vmatprep.subr.mxu0 0.0
      %725 = vmatpush1.msra.mxu0 0.0
      %726 = vmatprep.subr.mxu0 0.0
      %727 = vmatpush1.msra.mxu0 0.0
      %728 = vmatprep.subr.mxu0 0.0
      %729 = vmatpush1.msra.mxu0 0.0
      %730 = vmatprep.subr.mxu0 0.0
      %731 = vmatpush1.msra.mxu0 0.0
      %732 = vmatprep.subr.mxu0 0.0
      %733 = vmatpush1.msra.mxu0 0.0
      %734 = vmatprep.subr.mxu0 0.0
      %735 = vmatpush1.msra.mxu0 0.0
      %736 = vmatprep.subr.mxu0 0.0
      %737 = vmatpush1.msra.mxu0 0.0
      %738 = vmatprep.subr.mxu0 0.0
      %739 = vmatpush1.msra.mxu0 0.0
      %740 = vmatprep.subr.mxu0 0.0
      %741 = vmatpush1.msra.mxu0 0.0
      %742 = vmatprep.subr.mxu0 0.0
      %743 = vmatpush1.msra.mxu0 0.0
      %744 = vmatprep.subr.mxu0 0.0
      %745 = vmatpush1.msra.mxu0 0.0
      %746 = vmatprep.subr.mxu0 0.0
      %747 = vmatpush1.msra.mxu0 0.0
      %748 = vmatprep.subr.mxu0 0.0
      %749 = vmatpush1.msra.mxu0 0.0
      %750 = vmatprep.subr.mxu0 0.0
      %751 = vmatpush1.msra.mxu0 0.0
      %752 = vmatprep.subr.mxu0 0.0
      %753 = vmatpush1.msra.mxu0 0.0
      %754 = vmatprep.subr.mxu0 0.0
      %755 = vmatpush1.msra.mxu0 0.0
      %756 = vmatprep.subr.mxu0 0.0
      %757 = vmatpush1.msra.mxu0 0.0
      %758 = vmatprep.subr.mxu0 0.0
      %759 = vmatpush1.msra.mxu0 0.0
      %760 = vmatprep.subr.mxu0 0.0
      %761 = vmatpush1.msra.mxu0 0.0
      %762 = vmatprep.subr.mxu0 0.0
      %763 = vmatpush1.msra.mxu0 0.0
      %764 = vmatprep.subr.mxu0 0.0
      %765 = vmatpush1.msra.mxu0 0.0
      %766 = vmatprep.subr.mxu0 0.0
      %767 = vmatpush1.msra.mxu0 0.0
      %768 = vmatprep.subr.mxu0 0.0
      %769 = vmatpush1.msra.mxu0 0.0
      %770 = vmatprep.subr.mxu0 0.0
      %771 = vmatpush1.msra.mxu0 0.0
      %772 = vmatprep.subr.mxu0 0.0
      %773 = vmatpush1.msra.mxu0 0.0
      %774 = vmatprep.subr.mxu0 0.0
      %775 = vmatpush1.msra.mxu0 0.0
      %776 = vmatprep.subr.mxu0 0.0
      %777 = vmatpush1.msra.mxu0 0.0
      %778 = vmatprep.subr.mxu0 0.0
      %779 = vmatpush1.msra.mxu0 0.0
      %780 = vmatprep.subr.mxu0 0.0
      %781 = vmatpush1.msra.mxu0 0.0
      %782 = vmatprep.subr.mxu0 0.0
      %783 = vmatpush1.msra.mxu0 0.0
      %784 = vmatprep.mubr.f32.mxu0 0.0
      %785 = vmatmul.mubr.f32.gmra.mrb[0].mxu0 %v718
      %v786 = vpop.f32.mrb[0].mxu0
      %v787 = vadd.f32 %v714, %v786
      %v788 = vpop.f32.mrb[0].mxu0
      %789 = vdwg.mxu0
      %v790 = vmax.f32 %v787, 0.0
      %v791 = vld [vmem:[%s3] sm:$0xff]
      %v792 = vld [vmem:[%s3 + $0x8] sm:$0xff]
      %v793 = vld [vmem:[%s3 + $0x10] sm:$0xff]
      %v794 = vld [vmem:[%s3 + $0x18] sm:$0xff]
      %v795 = vld [vmem:[%s4] sm:$0x1]
      %v797 = vlaneseq
      %v798 = vshrl.u32 %v797, 7
      %v799 = vsub.s32 0, %v798
      %v800 = vrot.slane %v795, %v799
      %vm802 = vcmask 261120
      %v804 = vsel %vm802, %v790, 0
      %806 = vmatprep.subr.mxu0 0.0
      %807 = vmatpush1.msra.mxu0 %v791
      %808 = vmatprep.subr.mxu0 0.0
      %809 = vmatpush1.msra.mxu0 %v792
      %810 = vmatprep.subr.mxu0 0.0
      %811 = vmatpush1.msra.mxu0 %v793
      %812 = vmatprep.subr.mxu0 0.0
      %813 = vmatpush1.msra.mxu0 %v794
      %814 = vmatprep.subr.mxu0 0.0
      %815 = vmatpush1.msra.mxu0 0.0
      %816 = vmatprep.subr.mxu0 0.0
      %817 = vmatpush1.msra.mxu0 0.0
      %818 = vmatprep.subr.mxu0 0.0
      %819 = vmatpush1.msra.mxu0 0.0
      %820 = vmatprep.subr.mxu0 0.0
      %821 = vmatpush1.msra.mxu0 0.0
      %822 = vmatprep.subr.mxu0 0.0
      %823 = vmatpush1.msra.mxu0 0.0
      %824 = vmatprep.subr.mxu0 0.0
      %825 = vmatpush1.msra.mxu0 0.0
      %826 = vmatprep.subr.mxu0 0.0
      %827 = vmatpush1.msra.mxu0 0.0
      %828 = vmatprep.subr.mxu0 0.0
      %829 = vmatpush1.msra.mxu0 0.0
      %830 = vmatprep.subr.mxu0 0.0
      %831 = vmatpush1.msra.mxu0 0.0
      %832 = vmatprep.subr.mxu0 0.0
      %833 = vmatpush1.msra.mxu0 0.0
      %834 = vmatprep.subr.mxu0 0.0
      %835 = vmatpush1.msra.mxu0 0.0
      %836 = vmatprep.subr.mxu0 0.0
      %837 = vmatpush1.msra.mxu0 0.0
      %838 = vmatprep.subr.mxu0 0.0
      %839 = vmatpush1.msra.mxu0 0.0
      %840 = vmatprep.subr.mxu0 0.0
      %841 = vmatpush1.msra.mxu0 0.0
      %842 = vmatprep.subr.mxu0 0.0
      %843 = vmatpush1.msra.mxu0 0.0
      %844 = vmatprep.subr.mxu0 0.0
      %845 = vmatpush1.msra.mxu0 0.0
      %846 = vmatprep.subr.mxu0 0.0
      %847 = vmatpush1.msra.mxu0 0.0
      %848 = vmatprep.subr.mxu0 0.0
      %849 = vmatpush1.msra.mxu0 0.0
      %850 = vmatprep.subr.mxu0 0.0
      %851 = vmatpush1.msra.mxu0 0.0
      %852 = vmatprep.subr.mxu0 0.0
      %853 = vmatpush1.msra.mxu0 0.0
      %854 = vmatprep.subr.mxu0 0.0
      %855 = vmatpush1.msra.mxu0 0.0
      %856 = vmatprep.subr.mxu0 0.0
      %857 = vmatpush1.msra.mxu0 0.0
      %858 = vmatprep.subr.mxu0 0.0
      %859 = vmatpush1.msra.mxu0 0.0
      %860 = vmatprep.subr.mxu0 0.0
      %861 = vmatpush1.msra.mxu0 0.0
      %862 = vmatprep.subr.mxu0 0.0
      %863 = vmatpush1.msra.mxu0 0.0
      %864 = vmatprep.subr.mxu0 0.0
      %865 = vmatpush1.msra.mxu0 0.0
      %866 = vmatprep.subr.mxu0 0.0
      %867 = vmatpush1.msra.mxu0 0.0
      %868 = vmatprep.subr.mxu0 0.0
      %869 = vmatpush1.msra.mxu0 0.0
      %870 = vmatprep.mubr.f32.mxu0 0.0
      %871 = vmatmul.mubr.f32.gmra.mrb[0].mxu0 %v804
      %v872 = vpop.f32.mrb[0].mxu0
      %v873 = vadd.f32 %v800, %v872
      %v874 = vpop.f32.mrb[0].mxu0
      %875 = vdwg.mxu0
      %v876 = vmax.f32 %v873, 0.0
      %v877 = vld [vmem:[%s5] sm:$0xff]
      %v878 = vld [vmem:[%s5 + $0x8] sm:$0xff]
      %v879 = vld [vmem:[%s5 + $0x10] sm:$0xff]
      %v880 = vld [vmem:[%s5 + $0x18] sm:$0xff]
      %v881 = vld [vmem:[%s5 + $0x20] sm:$0xff]
      %v882 = vld [vmem:[%s5 + $0x28] sm:$0xff]
      %v883 = vld [vmem:[%s5 + $0x30] sm:$0xff]
      %v884 = vld [vmem:[%s5 + $0x38] sm:$0xff]
      %v885 = vld [vmem:[%s5 + $0x40] sm:$0xff]
      %v886 = vld [vmem:[%s5 + $0x48] sm:$0xff]
      %v887 = vld [vmem:[%s5 + $0x50] sm:$0xff]
      %v888 = vld [vmem:[%s5 + $0x58] sm:$0xff]
      %v889 = vld [vmem:[%s5 + $0x60] sm:$0xff]
      %v890 = vld [vmem:[%s5 + $0x68] sm:$0xff]
      %v891 = vld [vmem:[%s5 + $0x70] sm:$0xff]
      %v892 = vld [vmem:[%s5 + $0x78] sm:$0xff]
      %v893 = vld [vmem:[%s5 + $0x80] sm:$0xff]
      %v894 = vld [vmem:[%s5 + $0x88] sm:$0xff]
      %v895 = vld [vmem:[%s5 + $0x90] sm:$0xff]
      %v896 = vld [vmem:[%s5 + $0x98] sm:$0xff]
      %v897 = vld [vmem:[%s5 + $0xa0] sm:$0xff]
      %v898 = vld [vmem:[%s5 + $0xa8] sm:$0xff]
      %v899 = vld [vmem:[%s5 + $0xb0] sm:$0xff]
      %v900 = vld [vmem:[%s5 + $0xb8] sm:$0xff]
      %v901 = vld [vmem:[%s5 + $0xc0] sm:$0xff]
      %v902 = vld [vmem:[%s5 + $0xc8] sm:$0xff]
      %v903 = vld [vmem:[%s5 + $0xd0] sm:$0xff]
      %v904 = vld [vmem:[%s5 + $0xd8] sm:$0xff]
      %v905 = vld [vmem:[%s5 + $0xe0] sm:$0xff]
      %v906 = vld [vmem:[%s5 + $0xe8] sm:$0xff]
      %v907 = vld [vmem:[%s5 + $0xf0] sm:$0xff]
      %v908 = vld [vmem:[%s5 + $0xf8] sm:$0xff]
      %v909 = vld [vmem:[%s6] sm:$0xf]
      %v911 = vlaneseq
      %v912 = vshrl.u32 %v911, 7
      %v913 = vsub.s32 0, %v912
      %v914 = vrot.slane %v909, %v913
      %v915 = vlaneseq
      %v916 = vshrl.u32 %v915, 7
      %v917 = vsub.s32 1, %v916
      %v918 = vrot.slane %v909, %v917
      %v919 = vlaneseq
      %v920 = vshrl.u32 %v919, 7
      %v921 = vsub.s32 2, %v920
      %v922 = vrot.slane %v909, %v921
      %v923 = vlaneseq
      %v924 = vshrl.u32 %v923, 7
      %v925 = vsub.s32 3, %v924
      %v926 = vrot.slane %v909, %v925
      %vm931 = vcmask 523264
      %v933 = vsel %vm931, %v876, 0
      %935 = vmatprep.subr.mxu0 %v878
      %936 = vmatpush1.msra.mxu0 %v877
      %937 = vmatprep.subr.mxu0 %v882
      %938 = vmatpush1.msra.mxu0 %v881
      %939 = vmatprep.subr.mxu0 %v886
      %940 = vmatpush1.msra.mxu0 %v885
      %941 = vmatprep.subr.mxu0 %v890
      %942 = vmatpush1.msra.mxu0 %v889
      %943 = vmatprep.subr.mxu0 %v894
      %944 = vmatpush1.msra.mxu0 %v893
      %945 = vmatprep.subr.mxu0 %v898
      %946 = vmatpush1.msra.mxu0 %v897
      %947 = vmatprep.subr.mxu0 %v902
      %948 = vmatpush1.msra.mxu0 %v901
      %949 = vmatprep.subr.mxu0 %v906
      %950 = vmatpush1.msra.mxu0 %v905
      %951 = vmatprep.subr.mxu0 0.0
      %952 = vmatpush1.msra.mxu0 0.0
      %953 = vmatprep.subr.mxu0 0.0
      %954 = vmatpush1.msra.mxu0 0.0
      %955 = vmatprep.subr.mxu0 0.0
      %956 = vmatpush1.msra.mxu0 0.0
      %957 = vmatprep.subr.mxu0 0.0
      %958 = vmatpush1.msra.mxu0 0.0
      %959 = vmatprep.subr.mxu0 0.0
      %960 = vmatpush1.msra.mxu0 0.0
      %961 = vmatprep.subr.mxu0 0.0
      %962 = vmatpush1.msra.mxu0 0.0
      %963 = vmatprep.subr.mxu0 0.0
      %964 = vmatpush1.msra.mxu0 0.0
      %965 = vmatprep.subr.mxu0 0.0
      %966 = vmatpush1.msra.mxu0 0.0
      %967 = vmatprep.subr.mxu0 0.0
      %968 = vmatpush1.msra.mxu0 0.0
      %969 = vmatprep.subr.mxu0 0.0
      %970 = vmatpush1.msra.mxu0 0.0
      %971 = vmatprep.subr.mxu0 0.0
      %972 = vmatpush1.msra.mxu0 0.0
      %973 = vmatprep.subr.mxu0 0.0
      %974 = vmatpush1.msra.mxu0 0.0
      %975 = vmatprep.subr.mxu0 0.0
      %976 = vmatpush1.msra.mxu0 0.0
      %977 = vmatprep.subr.mxu0 0.0
      %978 = vmatpush1.msra.mxu0 0.0
      %979 = vmatprep.subr.mxu0 0.0
      %980 = vmatpush1.msra.mxu0 0.0
      %981 = vmatprep.subr.mxu0 0.0
      %982 = vmatpush1.msra.mxu0 0.0
      %983 = vmatprep.subr.mxu0 0.0
      %984 = vmatpush1.msra.mxu0 0.0
      %985 = vmatprep.subr.mxu0 0.0
      %986 = vmatpush1.msra.mxu0 0.0
      %987 = vmatprep.subr.mxu0 0.0
      %988 = vmatpush1.msra.mxu0 0.0
      %989 = vmatprep.subr.mxu0 0.0
      %990 = vmatpush1.msra.mxu0 0.0
      %991 = vmatprep.subr.mxu0 0.0
      %992 = vmatpush1.msra.mxu0 0.0
      %993 = vmatprep.subr.mxu0 0.0
      %994 = vmatpush1.msra.mxu0 0.0
      %995 = vmatprep.subr.mxu0 0.0
      %996 = vmatpush1.msra.mxu0 0.0
      %997 = vmatprep.subr.mxu0 0.0
      %998 = vmatpush1.msra.mxu0 0.0
      %999 = vmatprep.mubr.f32.mxu0 0.0
      %1000 = vmatmul.mubr.f32.gmra.mrb[0].mxu0 %v933
      %v1001 = vpop.f32.mrb[0].mxu0
      %v1002 = vadd.f32 %v914, %v1001
      %v1003 = vpop.f32.mrb[0].mxu0
      %v1004 = vadd.f32 %v918, %v1003
      %1005 = vdwg.mxu0
      %1006 = vmatprep.subr.mxu0 %v880
      %1007 = vmatpush1.msra.mxu0 %v879
      %1008 = vmatprep.subr.mxu0 %v884
      %1009 = vmatpush1.msra.mxu0 %v883
      %1010 = vmatprep.subr.mxu0 %v888
      %1011 = vmatpush1.msra.mxu0 %v887
      %1012 = vmatprep.subr.mxu0 %v892
      %1013 = vmatpush1.msra.mxu0 %v891
      %1014 = vmatprep.subr.mxu0 %v896
      %1015 = vmatpush1.msra.mxu0 %v895
      %1016 = vmatprep.subr.mxu0 %v900
      %1017 = vmatpush1.msra.mxu0 %v899
      %1018 = vmatprep.subr.mxu0 %v904
      %1019 = vmatpush1.msra.mxu0 %v903
      %1020 = vmatprep.subr.mxu0 %v908
      %1021 = vmatpush1.msra.mxu0 %v907
      %1022 = vmatprep.subr.mxu0 0.0
      %1023 = vmatpush1.msra.mxu0 0.0
      %1024 = vmatprep.subr.mxu0 0.0
      %1025 = vmatpush1.msra.mxu0 0.0
      %1026 = vmatprep.subr.mxu0 0.0
      %1027 = vmatpush1.msra.mxu0 0.0
      %1028 = vmatprep.subr.mxu0 0.0
      %1029 = vmatpush1.msra.mxu0 0.0
      %1030 = vmatprep.subr.mxu0 0.0
      %1031 = vmatpush1.msra.mxu0 0.0
      %1032 = vmatprep.subr.mxu0 0.0
      %1033 = vmatpush1.msra.mxu0 0.0
      %1034 = vmatprep.subr.mxu0 0.0
      %1035 = vmatpush1.msra.mxu0 0.0
      %1036 = vmatprep.subr.mxu0 0.0
      %1037 = vmatpush1.msra.mxu0 0.0
      %1038 = vmatprep.subr.mxu0 0.0
      %1039 = vmatpush1.msra.mxu0 0.0
      %1040 = vmatprep.subr.mxu0 0.0
      %1041 = vmatpush1.msra.mxu0 0.0
      %1042 = vmatprep.subr.mxu0 0.0
      %1043 = vmatpush1.msra.mxu0 0.0
      %1044 = vmatprep.subr.mxu0 0.0
      %1045 = vmatpush1.msra.mxu0 0.0
      %1046 = vmatprep.subr.mxu0 0.0
      %1047 = vmatpush1.msra.mxu0 0.0
      %1048 = vmatprep.subr.mxu0 0.0
      %1049 = vmatpush1.msra.mxu0 0.0
      %1050 = vmatprep.subr.mxu0 0.0
      %1051 = vmatpush1.msra.mxu0 0.0
      %1052 = vmatprep.subr.mxu0 0.0
      %1053 = vmatpush1.msra.mxu0 0.0
      %1054 = vmatprep.subr.mxu0 0.0
      %1055 = vmatpush1.msra.mxu0 0.0
      %1056 = vmatprep.subr.mxu0 0.0
      %1057 = vmatpush1.msra.mxu0 0.0
      %1058 = vmatprep.subr.mxu0 0.0
      %1059 = vmatpush1.msra.mxu0 0.0
      %1060 = vmatprep.subr.mxu0 0.0
      %1061 = vmatpush1.msra.mxu0 0.0
      %1062 = vmatprep.subr.mxu0 0.0
      %1063 = vmatpush1.msra.mxu0 0.0
      %1064 = vmatprep.subr.mxu0 0.0
      %1065 = vmatpush1.msra.mxu0 0.0
      %1066 = vmatprep.subr.mxu0 0.0
      %1067 = vmatpush1.msra.mxu0 0.0
      %1068 = vmatprep.subr.mxu0 0.0
      %1069 = vmatpush1.msra.mxu0 0.0
      %1070 = vmatprep.mubr.f32.mxu0 0.0
      %1071 = vmatmul.mubr.f32.gmra.mrb[0].mxu0 %v933
      %v1072 = vpop.f32.mrb[0].mxu0
      %v1073 = vadd.f32 %v922, %v1072
      %v1074 = vpop.f32.mrb[0].mxu0
      %v1075 = vadd.f32 %v926, %v1074
      %1076 = vdwg.mxu0
      %v1077 = vmul.f32 %v1073, 0.5
      %v1078 = vmul.f32 %v1075, 0.5
      %v1079 = vmul.f32 %v1077, 1.442695
      %v1080 = vpow.pop %v1079
      %v1081 = vmul.f32 %v1078, 1.442695
      %v1082 = vpow.pop %v1081
      %v1083 = vld [vmem:[%s7] sm:$0xff]
      %v1084 = vld [vmem:[%s7 + $0x8] sm:$0xff]
      %v1085 = vld [vmem:[%s7 + $0x10] sm:$0xff]
      %v1086 = vld [vmem:[%s7 + $0x18] sm:$0xff]
      %v1087 = vld [vmem:[%s7 + $0x20] sm:$0xff]
      %v1088 = vld [vmem:[%s7 + $0x28] sm:$0xff]
      %v1089 = vld [vmem:[%s7 + $0x30] sm:$0xff]
      %v1090 = vld [vmem:[%s7 + $0x38] sm:$0xff]
      %v1091 = vld [vmem:[%s7 + $0x40] sm:$0xff]
      %v1092 = vld [vmem:[%s7 + $0x48] sm:$0xff]
      %v1093 = vld [vmem:[%s7 + $0x50] sm:$0xff]
      %v1094 = vld [vmem:[%s7 + $0x58] sm:$0xff]
      %v1095 = vld [vmem:[%s7 + $0x60] sm:$0xff]
      %v1096 = vld [vmem:[%s7 + $0x68] sm:$0xff]
      %v1097 = vld [vmem:[%s7 + $0x70] sm:$0xff]
      %v1098 = vld [vmem:[%s7 + $0x78] sm:$0xff]
      %v1099 = vld [vmem:[%s7 + $0x80] sm:$0xff]
      %v1100 = vld [vmem:[%s7 + $0x88] sm:$0xff]
      %v1101 = vld [vmem:[%s7 + $0x90] sm:$0xff]
      %v1102 = vld [vmem:[%s7 + $0x98] sm:$0xff]
      %v1103 = vld [vmem:[%s7 + $0xa0] sm:$0xff]
      %v1104 = vld [vmem:[%s7 + $0xa8] sm:$0xff]
      %v1105 = vld [vmem:[%s7 + $0xb0] sm:$0xff]
      %v1106 = vld [vmem:[%s7 + $0xb8] sm:$0xff]
      %v1107 = vld [vmem:[%s7 + $0xc0] sm:$0xff]
      %v1108 = vld [vmem:[%s7 + $0xc8] sm:$0xff]
      %v1109 = vld [vmem:[%s7 + $0xd0] sm:$0xff]
      %v1110 = vld [vmem:[%s7 + $0xd8] sm:$0xff]
      %v1111 = vld [vmem:[%s7 + $0xe0] sm:$0xff]
      %v1112 = vld [vmem:[%s7 + $0xe8] sm:$0xff]
      %v1113 = vld [vmem:[%s7 + $0xf0] sm:$0xff]
      %v1114 = vld [vmem:[%s7 + $0xf8] sm:$0xff]
      %v1115 = vld [vmem:[%s7 + $0x100] sm:$0xff]
      %v1116 = vld [vmem:[%s7 + $0x108] sm:$0xff]
      %v1117 = vld [vmem:[%s7 + $0x110] sm:$0xff]
      %v1118 = vld [vmem:[%s7 + $0x118] sm:$0xff]
      %v1119 = vld [vmem:[%s7 + $0x120] sm:$0xff]
      %v1120 = vld [vmem:[%s7 + $0x128] sm:$0xff]
      %v1121 = vld [vmem:[%s7 + $0x130] sm:$0xff]
      %v1122 = vld [vmem:[%s7 + $0x138] sm:$0xff]
      %v1123 = vld [vmem:[%s7 + $0x140] sm:$0xff]
      %v1124 = vld [vmem:[%s7 + $0x148] sm:$0xff]
      %v1125 = vld [vmem:[%s7 + $0x150] sm:$0xff]
      %v1126 = vld [vmem:[%s7 + $0x158] sm:$0xff]
      %v1127 = vld [vmem:[%s7 + $0x160] sm:$0xff]
      %v1128 = vld [vmem:[%s7 + $0x168] sm:$0xff]
      %v1129 = vld [vmem:[%s7 + $0x170] sm:$0xff]
      %v1130 = vld [vmem:[%s7 + $0x178] sm:$0xff]
      %v1131 = vld [vmem:[%s7 + $0x180] sm:$0xff]
      %v1132 = vld [vmem:[%s7 + $0x188] sm:$0xff]
      %v1133 = vld [vmem:[%s7 + $0x190] sm:$0xff]
      %v1134 = vld [vmem:[%s7 + $0x198] sm:$0xff]
      %v1135 = vld [vmem:[%s7 + $0x1a0] sm:$0xff]
      %v1136 = vld [vmem:[%s7 + $0x1a8] sm:$0xff]
      %v1137 = vld [vmem:[%s7 + $0x1b0] sm:$0xff]
      %v1138 = vld [vmem:[%s7 + $0x1b8] sm:$0xff]
      %v1139 = vld [vmem:[%s7 + $0x1c0] sm:$0xff]
      %v1140 = vld [vmem:[%s7 + $0x1c8] sm:$0xff]
      %v1141 = vld [vmem:[%s7 + $0x1d0] sm:$0xff]
      %v1142 = vld [vmem:[%s7 + $0x1d8] sm:$0xff]
      %v1143 = vld [vmem:[%s7 + $0x1e0] sm:$0xff]
      %v1144 = vld [vmem:[%s7 + $0x1e8] sm:$0xff]
      %v1145 = vld [vmem:[%s7 + $0x1f0] sm:$0xff]
      %v1146 = vld [vmem:[%s7 + $0x1f8] sm:$0xff]
      %1147 = vmatprep.subr.mxu0 %v1084
      %1148 = vmatpush1.msra.mxu0 %v1083
      %1149 = vmatprep.subr.mxu0 %v1086
      %1150 = vmatpush1.msra.mxu0 %v1085
      %1151 = vmatprep.subr.mxu0 %v1088
      %1152 = vmatpush1.msra.mxu0 %v1087
      %1153 = vmatprep.subr.mxu0 %v1090
      %1154 = vmatpush1.msra.mxu0 %v1089
      %1155 = vmatprep.subr.mxu0 %v1092
      %1156 = vmatpush1.msra.mxu0 %v1091
      %1157 = vmatprep.subr.mxu0 %v1094
      %1158 = vmatpush1.msra.mxu0 %v1093
      %1159 = vmatprep.subr.mxu0 %v1096
      %1160 = vmatpush1.msra.mxu0 %v1095
      %1161 = vmatprep.subr.mxu0 %v1098
      %1162 = vmatpush1.msra.mxu0 %v1097
      %1163 = vmatprep.subr.mxu0 %v1100
      %1164 = vmatpush1.msra.mxu0 %v1099
      %1165 = vmatprep.subr.mxu0 %v1102
      %1166 = vmatpush1.msra.mxu0 %v1101
      %1167 = vmatprep.subr.mxu0 %v1104
      %1168 = vmatpush1.msra.mxu0 %v1103
      %1169 = vmatprep.subr.mxu0 %v1106
      %1170 = vmatpush1.msra.mxu0 %v1105
      %1171 = vmatprep.subr.mxu0 %v1108
      %1172 = vmatpush1.msra.mxu0 %v1107
      %1173 = vmatprep.subr.mxu0 %v1110
      %1174 = vmatpush1.msra.mxu0 %v1109
      %1175 = vmatprep.subr.mxu0 %v1112
      %1176 = vmatpush1.msra.mxu0 %v1111
      %1177 = vmatprep.subr.mxu0 %v1114
      %1178 = vmatpush1.msra.mxu0 %v1113
      %1179 = vmatprep.subr.mxu0 %v1116
      %1180 = vmatpush1.msra.mxu0 %v1115
      %1181 = vmatprep.subr.mxu0 %v1118
      %1182 = vmatpush1.msra.mxu0 %v1117
      %1183 = vmatprep.subr.mxu0 %v1120
      %1184 = vmatpush1.msra.mxu0 %v1119
      %1185 = vmatprep.subr.mxu0 %v1122
      %1186 = vmatpush1.msra.mxu0 %v1121
      %1187 = vmatprep.subr.mxu0 %v1124
      %1188 = vmatpush1.msra.mxu0 %v1123
      %1189 = vmatprep.subr.mxu0 %v1126
      %1190 = vmatpush1.msra.mxu0 %v1125
      %1191 = vmatprep.subr.mxu0 %v1128
      %1192 = vmatpush1.msra.mxu0 %v1127
      %1193 = vmatprep.subr.mxu0 %v1130
      %1194 = vmatpush1.msra.mxu0 %v1129
      %1195 = vmatprep.subr.mxu0 %v1132
      %1196 = vmatpush1.msra.mxu0 %v1131
      %1197 = vmatprep.subr.mxu0 %v1134
      %1198 = vmatpush1.msra.mxu0 %v1133
      %1199 = vmatprep.subr.mxu0 %v1136
      %1200 = vmatpush1.msra.mxu0 %v1135
      %1201 = vmatprep.subr.mxu0 %v1138
      %1202 = vmatpush1.msra.mxu0 %v1137
      %1203 = vmatprep.subr.mxu0 %v1140
      %1204 = vmatpush1.msra.mxu0 %v1139
      %1205 = vmatprep.subr.mxu0 %v1142
      %1206 = vmatpush1.msra.mxu0 %v1141
      %1207 = vmatprep.subr.mxu0 %v1144
      %1208 = vmatpush1.msra.mxu0 %v1143
      %1209 = vmatprep.subr.mxu0 %v1146
      %1210 = vmatpush1.msra.mxu0 %v1145
      %1211 = vmatprep.mubr.f32.mxu0 %v1082
      %1212 = vmatmul.mubr.f32.gmra.mrb[0].mxu0 %v1080
      %v1213 = vpop.f32.mrb[0].mxu0
      %v1214 = vadd.f32 0.0, %v1213
      %v1215 = vpop.f32.mrb[0].mxu0
      %v1216 = vadd.f32 0.0, %v1215
      %1217 = vdwg.mxu0
      %v1218 = vadd.f32 %v1002, %v1214
      %v1219 = vadd.f32 %v1004, %v1216
      %1220 = vst [vmem:[%s700] sm:$0xff] %v1218
      %1221 = vst [vmem:[%s700 + $0x8] sm:$0xff] %v1219
      %v1222 = vld [vmem:[%s8] sm:$0xff]
      %v1223 = vld [vmem:[%s8 + $0x8] sm:$0xff]
      %v1224 = vld [vmem:[%s8 + $0x10] sm:$0xff]
      %v1225 = vld [vmem:[%s8 + $0x18] sm:$0xff]
      %v1226 = vld [vmem:[%s8 + $0x20] sm:$0xff]
      %v1227 = vld [vmem:[%s8 + $0x28] sm:$0xff]
      %v1228 = vld [vmem:[%s8 + $0x30] sm:$0xff]
      %v1229 = vld [vmem:[%s8 + $0x38] sm:$0xff]
      %v1230 = vld [vmem:[%s8 + $0x40] sm:$0xff]
      %v1231 = vld [vmem:[%s8 + $0x48] sm:$0xff]
      %v1232 = vld [vmem:[%s8 + $0x50] sm:$0xff]
      %v1233 = vld [vmem:[%s8 + $0x58] sm:$0xff]
      %v1234 = vld [vmem:[%s8 + $0x60] sm:$0xff]
      %v1235 = vld [vmem:[%s8 + $0x68] sm:$0xff]
      %v1236 = vld [vmem:[%s8 + $0x70] sm:$0xff]
      %v1237 = vld [vmem:[%s8 + $0x78] sm:$0xff]
      %v1238 = vld [vmem:[%s9] sm:$0x1]
      %v1240 = vlaneseq
      %v1241 = vshrl.u32 %v1240, 7
      %v1242 = vsub.s32 0, %v1241
      %v1243 = vrot.slane %v1238, %v1242
      %1245 = vmatprep.subr.mxu0 0.0
      %1246 = vmatpush1.msra.mxu0 %v1222
      %1247 = vmatprep.subr.mxu0 0.0
      %1248 = vmatpush1.msra.mxu0 %v1223
      %1249 = vmatprep.subr.mxu0 0.0
      %1250 = vmatpush1.msra.mxu0 %v1224
      %1251 = vmatprep.subr.mxu0 0.0
      %1252 = vmatpush1.msra.mxu0 %v1225
      %1253 = vmatprep.subr.mxu0 0.0
      %1254 = vmatpush1.msra.mxu0 %v1226
      %1255 = vmatprep.subr.mxu0 0.0
      %1256 = vmatpush1.msra.mxu0 %v1227
      %1257 = vmatprep.subr.mxu0 0.0
      %1258 = vmatpush1.msra.mxu0 %v1228
      %1259 = vmatprep.subr.mxu0 0.0
      %1260 = vmatpush1.msra.mxu0 %v1229
      %1261 = vmatprep.subr.mxu0 0.0
      %1262 = vmatpush1.msra.mxu0 %v1230
      %1263 = vmatprep.subr.mxu0 0.0
      %1264 = vmatpush1.msra.mxu0 %v1231
      %1265 = vmatprep.subr.mxu0 0.0
      %1266 = vmatpush1.msra.mxu0 %v1232
      %1267 = vmatprep.subr.mxu0 0.0
      %1268 = vmatpush1.msra.mxu0 %v1233
      %1269 = vmatprep.subr.mxu0 0.0
      %1270 = vmatpush1.msra.mxu0 %v1234
      %1271 = vmatprep.subr.mxu0 0.0
      %1272 = vmatpush1.msra.mxu0 %v1235
      %1273 = vmatprep.subr.mxu0 0.0
      %1274 = vmatpush1.msra.mxu0 %v1236
      %1275 = vmatprep.subr.mxu0 0.0
      %1276 = vmatpush1.msra.mxu0 %v1237
      %1277 = vmatprep.subr.mxu0 0.0
      %1278 = vmatpush1.msra.mxu0 0.0
      %1279 = vmatprep.subr.mxu0 0.0
      %1280 = vmatpush1.msra.mxu0 0.0
      %1281 = vmatprep.subr.mxu0 0.0
      %1282 = vmatpush1.msra.mxu0 0.0
      %1283 = vmatprep.subr.mxu0 0.0
      %1284 = vmatpush1.msra.mxu0 0.0
      %1285 = vmatprep.subr.mxu0 0.0
      %1286 = vmatpush1.msra.mxu0 0.0
      %1287 = vmatprep.subr.mxu0 0.0
      %1288 = vmatpush1.msra.mxu0 0.0
      %1289 = vmatprep.subr.mxu0 0.0
      %1290 = vmatpush1.msra.mxu0 0.0
      %1291 = vmatprep.subr.mxu0 0.0
      %1292 = vmatpush1.msra.mxu0 0.0
      %1293 = vmatprep.subr.mxu0 0.0
      %1294 = vmatpush1.msra.mxu0 0.0
      %1295 = vmatprep.subr.mxu0 0.0
      %1296 = vmatpush1.msra.mxu0 0.0
      %1297 = vmatprep.subr.mxu0 0.0
      %1298 = vmatpush1.msra.mxu0 0.0
      %1299 = vmatprep.subr.mxu0 0.0
      %1300 = vmatpush1.msra.mxu0 0.0
      %1301 = vmatprep.subr.mxu0 0.0
      %1302 = vmatpush1.msra.mxu0 0.0
      %1303 = vmatprep.subr.mxu0 0.0
      %1304 = vmatpush1.msra.mxu0 0.0
      %1305 = vmatprep.subr.mxu0 0.0
      %1306 = vmatpush1.msra.mxu0 0.0
      %1307 = vmatprep.subr.mxu0 0.0
      %1308 = vmatpush1.msra.mxu0 0.0
      %1309 = vmatprep.mubr.f32.mxu0 0.0
      %1310 = vmatmul.mubr.f32.gmra.mrb[0].mxu0 %v1218
      %v1311 = vpop.f32.mrb[0].mxu0
      %v1312 = vadd.f32 %v1243, %v1311
      %v1313 = vpop.f32.mrb[0].mxu0
      %1314 = vdwg.mxu0
      %v1315 = vmax.f32 %v1312, 0.0
      %v1316 = vld [vmem:[%s10] sm:$0xff]
      %v1317 = vld [vmem:[%s10 + $0x8] sm:$0xff]
      %v1318 = vld [vmem:[%s10 + $0x10] sm:$0xff]
      %v1319 = vld [vmem:[%s10 + $0x18] sm:$0xff]
      %v1320 = vld [vmem:[%s10 + $0x20] sm:$0xff]
      %v1321 = vld [vmem:[%s10 + $0x28] sm:$0xff]
      %v1322 = vld [vmem:[%s10 + $0x30] sm:$0xff]
      %v1323 = vld [vmem:[%s10 + $0x38] sm:$0xff]
      %v1324 = vld [vmem:[%s11] sm:$0x1]
      %v1326 = vlaneseq
      %v1327 = vshrl.u32 %v1326, 7
      %v1328 = vsub.s32 0, %v1327
      %v1329 = vrot.slane %v1324, %v1328
      %v1332 = vsel %vm931, %v1315, 0
      %1334 = vmatprep.subr.mxu0 0.0
      %1335 = vmatpush1.msra.mxu0 %v1316
      %1336 = vmatprep.subr.mxu0 0.0
      %1337 = vmatpush1.msra.mxu0 %v1317
      %1338 = vmatprep.subr.mxu0 0.0
      %1339 = vmatpush1.msra.mxu0 %v1318
      %1340 = vmatprep.subr.mxu0 0.0
      %1341 = vmatpush1.msra.mxu0 %v1319
      %1342 = vmatprep.subr.mxu0 0.0
      %1343 = vmatpush1.msra.mxu0 %v1320
      %1344 = vmatprep.subr.mxu0 0.0
      %1345 = vmatpush1.msra.mxu0 %v1321
      %1346 = vmatprep.subr.mxu0 0.0
      %1347 = vmatpush1.msra.mxu0 %v1322
      %1348 = vmatprep.subr.mxu0 0.0
      %1349 = vmatpush1.msra.mxu0 %v1323
      %1350 = vmatprep.subr.mxu0 0.0
      %1351 = vmatpush1.msra.mxu0 0.0
      %1352 = vmatprep.subr.mxu0 0.0
      %1353 = vmatpush1.msra.mxu0 0.0
      %1354 = vmatprep.subr.mxu0 0.0
      %1355 = vmatpush1.msra.mxu0 0.0
      %1356 = vmatprep.subr.mxu0 0.0
      %1357 = vmatpush1.msra.mxu0 0.0
      %1358 = vmatprep.subr.mxu0 0.0
      %1359 = vmatpush1.msra.mxu0 0.0
      %1360 = vmatprep.subr.mxu0 0.0
      %1361 = vmatpush1.msra.mxu0 0.0
      %1362 = vmatprep.subr.mxu0 0.0
      %1363 = vmatpush1.msra.mxu0 0.0
      %1364 = vmatprep.subr.mxu0 0.0
      %1365 = vmatpush1.msra.mxu0 0.0
      %1366 = vmatprep.subr.mxu0 0.0
      %1367 = vmatpush1.msra.mxu0 0.0
      %1368 = vmatprep.subr.mxu0 0.0
      %1369 = vmatpush1.msra.mxu0 0.0
      %1370 = vmatprep.subr.mxu0 0.0
      %1371 = vmatpush1.msra.mxu0 0.0
      %1372 = vmatprep.subr.mxu0 0.0
      %1373 = vmatpush1.msra.mxu0 0.0
      %1374 = vmatprep.subr.mxu0 0.0
      %1375 = vmatpush1.msra.mxu0 0.0
      %1376 = vmatprep.subr.mxu0 0.0
      %1377 = vmatpush1.msra.mxu0 0.0
      %1378 = vmatprep.subr.mxu0 0.0
      %1379 = vmatpush1.msra.mxu0 0.0
      %1380 = vmatprep.subr.mxu0 0.0
      %1381 = vmatpush1.msra.mxu0 0.0
      %1382 = vmatprep.subr.mxu0 0.0
      %1383 = vmatpush1.msra.mxu0 0.0
      %1384 = vmatprep.subr.mxu0 0.0
      %1385 = vmatpush1.msra.mxu0 0.0
      %1386 = vmatprep.subr.mxu0 0.0
      %1387 = vmatpush1.msra.mxu0 0.0
      %1388 = vmatprep.subr.mxu0 0.0
      %1389 = vmatpush1.msra.mxu0 0.0
      %1390 = vmatprep.subr.mxu0 0.0
      %1391 = vmatpush1.msra.mxu0 0.0
      %1392 = vmatprep.subr.mxu0 0.0
      %1393 = vmatpush1.msra.mxu0 0.0
      %1394 = vmatprep.subr.mxu0 0.0
      %1395 = vmatpush1.msra.mxu0 0.0
      %1396 = vmatprep.subr.mxu0 0.0
      %1397 = vmatpush1.msra.mxu0 0.0
      %1398 = vmatprep.mubr.f32.mxu0 0.0
      %1399 = vmatmul.mubr.f32.gmra.mrb[0].mxu0 %v1332
      %v1400 = vpop.f32.mrb[0].mxu0
      %v1401 = vadd.f32 %v1329, %v1400
      %v1402 = vpop.f32.mrb[0].mxu0
      %1403 = vdwg.mxu0
      %v1404 = vmax.f32 %v1401, 0.0
      %v1405 = vld [vmem:[%s16] sm:$0xff]
      %v1406 = vld [vmem:[%s16 + $0x8] sm:$0xff]
      %v1407 = vld [vmem:[%s16 + $0x10] sm:$0xff]
      %v1408 = vld [vmem:[%s16 + $0x18] sm:$0xff]
      %v1409 = vld [vmem:[%s17] sm:$0x1]
      %v1411 = vlaneseq
      %v1412 = vshrl.u32 %v1411, 7
      %v1413 = vsub.s32 0, %v1412
      %v1414 = vrot.slane %v1409, %v1413
      %v1417 = vsel %vm802, %v1404, 0
      %1419 = vmatprep.subr.mxu0 0.0
      %1420 = vmatpush1.msra.mxu0 %v1405
      %1421 = vmatprep.subr.mxu0 0.0
      %1422 = vmatpush1.msra.mxu0 %v1406
      %1423 = vmatprep.subr.mxu0 0.0
      %1424 = vmatpush1.msra.mxu0 %v1407
      %1425 = vmatprep.subr.mxu0 0.0
      %1426 = vmatpush1.msra.mxu0 %v1408
      %1427 = vmatprep.subr.mxu0 0.0
      %1428 = vmatpush1.msra.mxu0 0.0
      %1429 = vmatprep.subr.mxu0 0.0
      %1430 = vmatpush1.msra.mxu0 0.0
      %1431 = vmatprep.subr.mxu0 0.0
      %1432 = vmatpush1.msra.mxu0 0.0
      %1433 = vmatprep.subr.mxu0 0.0
      %1434 = vmatpush1.msra.mxu0 0.0
      %1435 = vmatprep.subr.mxu0 0.0
      %1436 = vmatpush1.msra.mxu0 0.0
      %1437 = vmatprep.subr.mxu0 0.0
      %1438 = vmatpush1.msra.mxu0 0.0
      %1439 = vmatprep.subr.mxu0 0.0
      %1440 = vmatpush1.msra.mxu0 0.0
      %1441 = vmatprep.subr.mxu0 0.0
      %1442 = vmatpush1.msra.mxu0 0.0
      %1443 = vmatprep.subr.mxu0 0.0
      %1444 = vmatpush1.msra.mxu0 0.0
      %1445 = vmatprep.subr.mxu0 0.0
      %1446 = vmatpush1.msra.mxu0 0.0
      %1447 = vmatprep.subr.mxu0 0.0
      %1448 = vmatpush1.msra.mxu0 0.0
      %1449 = vmatprep.subr.mxu0 0.0
      %1450 = vmatpush1.msra.mxu0 0.0
      %1451 = vmatprep.subr.mxu0 0.0
      %1452 = vmatpush1.msra.mxu0 0.0
      %1453 = vmatprep.subr.mxu0 0.0
      %1454 = vmatpush1.msra.mxu0 0.0
      %1455 = vmatprep.subr.mxu0 0.0
      %1456 = vmatpush1.msra.mxu0 0.0
      %1457 = vmatprep.subr.mxu0 0.0
      %1458 = vmatpush1.msra.mxu0 0.0
      %1459 = vmatprep.subr.mxu0 0.0
      %1460 = vmatpush1.msra.mxu0 0.0
      %1461 = vmatprep.subr.mxu0 0.0
      %1462 = vmatpush1.msra.mxu0 0.0
      %1463 = vmatprep.subr.mxu0 0.0
      %1464 = vmatpush1.msra.mxu0 0.0
      %1465 = vmatprep.subr.mxu0 0.0
      %1466 = vmatpush1.msra.mxu0 0.0
      %1467 = vmatprep.subr.mxu0 0.0
      %1468 = vmatpush1.msra.mxu0 0.0
      %1469 = vmatprep.subr.mxu0 0.0
      %1470 = vmatpush1.msra.mxu0 0.0
      %1471 = vmatprep.subr.mxu0 0.0
      %1472 = vmatpush1.msra.mxu0 0.0
      %1473 = vmatprep.subr.mxu0 0.0
      %1474 = vmatpush1.msra.mxu0 0.0
      %1475 = vmatprep.subr.mxu0 0.0
      %1476 = vmatpush1.msra.mxu0 0.0
      %1477 = vmatprep.subr.mxu0 0.0
      %1478 = vmatpush1.msra.mxu0 0.0
      %1479 = vmatprep.subr.mxu0 0.0
      %1480 = vmatpush1.msra.mxu0 0.0
      %1481 = vmatprep.subr.mxu0 0.0
      %1482 = vmatpush1.msra.mxu0 0.0
      %1483 = vmatprep.mubr.f32.mxu0 0.0
      %1484 = vmatmul.mubr.f32.gmra.mrb[0].mxu0 %v1417
      %v1485 = vpop.f32.mrb[0].mxu0
      %v1486 = vadd.f32 %v1414, %v1485
      %v1487 = vpop.f32.mrb[0].mxu0
      %1488 = vdwg.mxu0
      %v1489 = vld [vmem:[%s12] sm:$0xff]
      %v1490 = vld [vmem:[%s12 + $0x8] sm:$0xff]
      %v1491 = vld [vmem:[%s12 + $0x10] sm:$0xff]
      %v1492 = vld [vmem:[%s12 + $0x18] sm:$0xff]
      %v1493 = vld [vmem:[%s12 + $0x20] sm:$0xff]
      %v1494 = vld [vmem:[%s12 + $0x28] sm:$0xff]
      %v1495 = vld [vmem:[%s12 + $0x30] sm:$0xff]
      %v1496 = vld [vmem:[%s12 + $0x38] sm:$0xff]
      %v1497 = vld [vmem:[%s12 + $0x40] sm:$0xff]
      %v1498 = vld [vmem:[%s12 + $0x48] sm:$0xff]
      %v1499 = vld [vmem:[%s12 + $0x50] sm:$0xff]
      %v1500 = vld [vmem:[%s12 + $0x58] sm:$0xff]
      %v1501 = vld [vmem:[%s12 + $0x60] sm:$0xff]
      %v1502 = vld [vmem:[%s12 + $0x68] sm:$0xff]
      %v1503 = vld [vmem:[%s12 + $0x70] sm:$0xff]
      %v1504 = vld [vmem:[%s12 + $0x78] sm:$0xff]
      %v1505 = vld [vmem:[%s13] sm:$0x1]
      %v1507 = vlaneseq
      %v1508 = vshrl.u32 %v1507, 7
      %v1509 = vsub.s32 0, %v1508
      %v1510 = vrot.slane %v1505, %v1509
      %1512 = vmatprep.subr.mxu0 0.0
      %1513 = vmatpush1.msra.mxu0 %v1489
      %1514 = vmatprep.subr.mxu0 0.0
      %1515 = vmatpush1.msra.mxu0 %v1490
      %1516 = vmatprep.subr.mxu0 0.0
      %1517 = vmatpush1.msra.mxu0 %v1491
      %1518 = vmatprep.subr.mxu0 0.0
      %1519 = vmatpush1.msra.mxu0 %v1492
      %1520 = vmatprep.subr.mxu0 0.0
      %1521 = vmatpush1.msra.mxu0 %v1493
      %1522 = vmatprep.subr.mxu0 0.0
      %1523 = vmatpush1.msra.mxu0 %v1494
      %1524 = vmatprep.subr.mxu0 0.0
      %1525 = vmatpush1.msra.mxu0 %v1495
      %1526 = vmatprep.subr.mxu0 0.0
      %1527 = vmatpush1.msra.mxu0 %v1496
      %1528 = vmatprep.subr.mxu0 0.0
      %1529 = vmatpush1.msra.mxu0 %v1497
      %1530 = vmatprep.subr.mxu0 0.0
      %1531 = vmatpush1.msra.mxu0 %v1498
      %1532 = vmatprep.subr.mxu0 0.0
      %1533 = vmatpush1.msra.mxu0 %v1499
      %1534 = vmatprep.subr.mxu0 0.0
      %1535 = vmatpush1.msra.mxu0 %v1500
      %1536 = vmatprep.subr.mxu0 0.0
      %1537 = vmatpush1.msra.mxu0 %v1501
      %1538 = vmatprep.subr.mxu0 0.0
      %1539 = vmatpush1.msra.mxu0 %v1502
      %1540 = vmatprep.subr.mxu0 0.0
      %1541 = vmatpush1.msra.mxu0 %v1503
      %1542 = vmatprep.subr.mxu0 0.0
      %1543 = vmatpush1.msra.mxu0 %v1504
      %1544 = vmatprep.subr.mxu0 0.0
      %1545 = vmatpush1.msra.mxu0 0.0
      %1546 = vmatprep.subr.mxu0 0.0
      %1547 = vmatpush1.msra.mxu0 0.0
      %1548 = vmatprep.subr.mxu0 0.0
      %1549 = vmatpush1.msra.mxu0 0.0
      %1550 = vmatprep.subr.mxu0 0.0
      %1551 = vmatpush1.msra.mxu0 0.0
      %1552 = vmatprep.subr.mxu0 0.0
      %1553 = vmatpush1.msra.mxu0 0.0
      %1554 = vmatprep.subr.mxu0 0.0
      %1555 = vmatpush1.msra.mxu0 0.0
      %1556 = vmatprep.subr.mxu0 0.0
      %1557 = vmatpush1.msra.mxu0 0.0
      %1558 = vmatprep.subr.mxu0 0.0
      %1559 = vmatpush1.msra.mxu0 0.0
      %1560 = vmatprep.subr.mxu0 0.0
      %1561 = vmatpush1.msra.mxu0 0.0
      %1562 = vmatprep.subr.mxu0 0.0
      %1563 = vmatpush1.msra.mxu0 0.0
      %1564 = vmatprep.subr.mxu0 0.0
      %1565 = vmatpush1.msra.mxu0 0.0
      %1566 = vmatprep.subr.mxu0 0.0
      %1567 = vmatpush1.msra.mxu0 0.0
      %1568 = vmatprep.subr.mxu0 0.0
      %1569 = vmatpush1.msra.mxu0 0.0
      %1570 = vmatprep.subr.mxu0 0.0
      %1571 = vmatpush1.msra.mxu0 0.0
      %1572 = vmatprep.subr.mxu0 0.0
      %1573 = vmatpush1.msra.mxu0 0.0
      %1574 = vmatprep.subr.mxu0 0.0
      %1575 = vmatpush1.msra.mxu0 0.0
      %1576 = vmatprep.mubr.f32.mxu0 0.0
      %1577 = vmatmul.mubr.f32.gmra.mrb[0].mxu0 %v1218
      %v1578 = vpop.f32.mrb[0].mxu0
      %v1579 = vadd.f32 %v1510, %v1578
      %v1580 = vpop.f32.mrb[0].mxu0
      %1581 = vdwg.mxu0
      %v1582 = vmax.f32 %v1579, 0.0
      %1583 = vmatprep.subr.mxu0 0.0
      %1584 = vmatpush1.msra.mxu0 %v1489
      %1585 = vmatprep.subr.mxu0 0.0
      %1586 = vmatpush1.msra.mxu0 %v1490
      %1587 = vmatprep.subr.mxu0 0.0
      %1588 = vmatpush1.msra.mxu0 %v1491
      %1589 = vmatprep.subr.mxu0 0.0
      %1590 = vmatpush1.msra.mxu0 %v1492
      %1591 = vmatprep.subr.mxu0 0.0
      %1592 = vmatpush1.msra.mxu0 %v1493
      %1593 = vmatprep.subr.mxu0 0.0
      %1594 = vmatpush1.msra.mxu0 %v1494
      %1595 = vmatprep.subr.mxu0 0.0
      %1596 = vmatpush1.msra.mxu0 %v1495
      %1597 = vmatprep.subr.mxu0 0.0
      %1598 = vmatpush1.msra.mxu0 %v1496
      %1599 = vmatprep.subr.mxu0 0.0
      %1600 = vmatpush1.msra.mxu0 %v1497
      %1601 = vmatprep.subr.mxu0 0.0
      %1602 = vmatpush1.msra.mxu0 %v1498
      %1603 = vmatprep.subr.mxu0 0.0
      %1604 = vmatpush1.msra.mxu0 %v1499
      %1605 = vmatprep.subr.mxu0 0.0
      %1606 = vmatpush1.msra.mxu0 %v1500
      %1607 = vmatprep.subr.mxu0 0.0
      %1608 = vmatpush1.msra.mxu0 %v1501
      %1609 = vmatprep.subr.mxu0 0.0
      %1610 = vmatpush1.msra.mxu0 %v1502
      %1611 = vmatprep.subr.mxu0 0.0
      %1612 = vmatpush1.msra.mxu0 %v1503
      %1613 = vmatprep.subr.mxu0 0.0
      %1614 = vmatpush1.msra.mxu0 %v1504
      %1615 = vmatprep.subr.mxu0 0.0
      %1616 = vmatpush1.msra.mxu0 0.0
      %1617 = vmatprep.subr.mxu0 0.0
      %1618 = vmatpush1.msra.mxu0 0.0
      %1619 = vmatprep.subr.mxu0 0.0
      %1620 = vmatpush1.msra.mxu0 0.0
      %1621 = vmatprep.subr.mxu0 0.0
      %1622 = vmatpush1.msra.mxu0 0.0
      %1623 = vmatprep.subr.mxu0 0.0
      %1624 = vmatpush1.msra.mxu0 0.0
      %1625 = vmatprep.subr.mxu0 0.0
      %1626 = vmatpush1.msra.mxu0 0.0
      %1627 = vmatprep.subr.mxu0 0.0
      %1628 = vmatpush1.msra.mxu0 0.0
      %1629 = vmatprep.subr.mxu0 0.0
      %1630 = vmatpush1.msra.mxu0 0.0
      %1631 = vmatprep.subr.mxu0 0.0
      %1632 = vmatpush1.msra.mxu0 0.0
      %1633 = vmatprep.subr.mxu0 0.0
      %1634 = vmatpush1.msra.mxu0 0.0
      %1635 = vmatprep.subr.mxu0 0.0
      %1636 = vmatpush1.msra.mxu0 0.0
      %1637 = vmatprep.subr.mxu0 0.0
      %1638 = vmatpush1.msra.mxu0 0.0
      %1639 = vmatprep.subr.mxu0 0.0
      %1640 = vmatpush1.msra.mxu0 0.0
      %1641 = vmatprep.subr.mxu0 0.0
      %1642 = vmatpush1.msra.mxu0 0.0
      %1643 = vmatprep.subr.mxu0 0.0
      %1644 = vmatpush1.msra.mxu0 0.0
      %1645 = vmatprep.subr.mxu0 0.0
      %1646 = vmatpush1.msra.mxu0 0.0
      %1647 = vmatprep.mubr.f32.mxu0 0.0
      %1648 = vmatmul.mubr.f32.gmra.mrb[0].mxu0 %v1219
      %v1649 = vpop.f32.mrb[0].mxu0
      %v1650 = vadd.f32 %v1510, %v1649
      %v1651 = vpop.f32.mrb[0].mxu0
      %1652 = vdwg.mxu0
      %v1653 = vmax.f32 %v1650, 0.0
      %v1654 = vld [vmem:[%s14] sm:$0xff]
      %v1655 = vld [vmem:[%s14 + $0x8] sm:$0xff]
      %v1656 = vld [vmem:[%s14 + $0x10] sm:$0xff]
      %v1657 = vld [vmem:[%s14 + $0x18] sm:$0xff]
      %v1658 = vld [vmem:[%s14 + $0x20] sm:$0xff]
      %v1659 = vld [vmem:[%s14 + $0x28] sm:$0xff]
      %v1660 = vld [vmem:[%s14 + $0x30] sm:$0xff]
      %v1661 = vld [vmem:[%s14 + $0x38] sm:$0xff]
      %v1662 = vld [vmem:[%s15] sm:$0x1]
      %v1664 = vlaneseq
      %v1665 = vshrl.u32 %v1664, 7
      %v1666 = vsub.s32 0, %v1665
      %v1667 = vrot.slane %v1662, %v1666
      %v1670 = vsel %vm931, %v1582, 0
      %1672 = vmatprep.subr.mxu0 0.0
      %1673 = vmatpush1.msra.mxu0 %v1654
      %1674 = vmatprep.subr.mxu0 0.0
      %1675 = vmatpush1.msra.mxu0 %v1655
      %1676 = vmatprep.subr.mxu0 0.0
      %1677 = vmatpush1.msra.mxu0 %v1656
      %1678 = vmatprep.subr.mxu0 0.0
      %1679 = vmatpush1.msra.mxu0 %v1657
      %1680 = vmatprep.subr.mxu0 0.0
      %1681 = vmatpush1.msra.mxu0 %v1658
      %1682 = vmatprep.subr.mxu0 0.0
      %1683 = vmatpush1.msra.mxu0 %v1659
      %1684 = vmatprep.subr.mxu0 0.0
      %1685 = vmatpush1.msra.mxu0 %v1660
      %1686 = vmatprep.subr.mxu0 0.0
      %1687 = vmatpush1.msra.mxu0 %v1661
      %1688 = vmatprep.subr.mxu0 0.0
      %1689 = vmatpush1.msra.mxu0 0.0
      %1690 = vmatprep.subr.mxu0 0.0
      %1691 = vmatpush1.msra.mxu0 0.0
      %1692 = vmatprep.subr.mxu0 0.0
      %1693 = vmatpush1.msra.mxu0 0.0
      %1694 = vmatprep.subr.mxu0 0.0
      %1695 = vmatpush1.msra.mxu0 0.0
      %1696 = vmatprep.subr.mxu0 0.0
      %1697 = vmatpush1.msra.mxu0 0.0
      %1698 = vmatprep.subr.mxu0 0.0
      %1699 = vmatpush1.msra.mxu0 0.0
      %1700 = vmatprep.subr.mxu0 0.0
      %1701 = vmatpush1.msra.mxu0 0.0
      %1702 = vmatprep.subr.mxu0 0.0
      %1703 = vmatpush1.msra.mxu0 0.0
      %1704 = vmatprep.subr.mxu0 0.0
      %1705 = vmatpush1.msra.mxu0 0.0
      %1706 = vmatprep.subr.mxu0 0.0
      %1707 = vmatpush1.msra.mxu0 0.0
      %1708 = vmatprep.subr.mxu0 0.0
      %1709 = vmatpush1.msra.mxu0 0.0
      %1710 = vmatprep.subr.mxu0 0.0
      %1711 = vmatpush1.msra.mxu0 0.0
      %1712 = vmatprep.subr.mxu0 0.0
      %1713 = vmatpush1.msra.mxu0 0.0
      %1714 = vmatprep.subr.mxu0 0.0
      %1715 = vmatpush1.msra.mxu0 0.0
      %1716 = vmatprep.subr.mxu0 0.0
      %1717 = vmatpush1.msra.mxu0 0.0
      %1718 = vmatprep.subr.mxu0 0.0
      %1719 = vmatpush1.msra.mxu0 0.0
      %1720 = vmatprep.subr.mxu0 0.0
      %1721 = vmatpush1.msra.mxu0 0.0
      %1722 = vmatprep.subr.mxu0 0.0
      %1723 = vmatpush1.msra.mxu0 0.0
      %1724 = vmatprep.subr.mxu0 0.0
      %1725 = vmatpush1.msra.mxu0 0.0
      %1726 = vmatprep.subr.mxu0 0.0
      %1727 = vmatpush1.msra.mxu0 0.0
      %1728 = vmatprep.subr.mxu0 0.0
      %1729 = vmatpush1.msra.mxu0 0.0
      %1730 = vmatprep.subr.mxu0 0.0
      %1731 = vmatpush1.msra.mxu0 0.0
      %1732 = vmatprep.subr.mxu0 0.0
      %1733 = vmatpush1.msra.mxu0 0.0
      %1734 = vmatprep.subr.mxu0 0.0
      %1735 = vmatpush1.msra.mxu0 0.0
      %1736 = vmatprep.mubr.f32.mxu0 0.0
      %1737 = vmatmul.mubr.f32.gmra.mrb[0].mxu0 %v1670
      %v1738 = vpop.f32.mrb[0].mxu0
      %v1739 = vadd.f32 %v1667, %v1738
      %v1740 = vpop.f32.mrb[0].mxu0
      %1741 = vdwg.mxu0
      %v1742 = vmax.f32 %v1739, 0.0
      %v1744 = vsel %vm931, %v1653, 0
      %1746 = vmatprep.subr.mxu0 0.0
      %1747 = vmatpush1.msra.mxu0 %v1654
      %1748 = vmatprep.subr.mxu0 0.0
      %1749 = vmatpush1.msra.mxu0 %v1655
      %1750 = vmatprep.subr.mxu0 0.0
      %1751 = vmatpush1.msra.mxu0 %v1656
      %1752 = vmatprep.subr.mxu0 0.0
      %1753 = vmatpush1.msra.mxu0 %v1657
      %1754 = vmatprep.subr.mxu0 0.0
      %1755 = vmatpush1.msra.mxu0 %v1658
      %1756 = vmatprep.subr.mxu0 0.0
      %1757 = vmatpush1.msra.mxu0 %v1659
      %1758 = vmatprep.subr.mxu0 0.0
      %1759 = vmatpush1.msra.mxu0 %v1660
      %1760 = vmatprep.subr.mxu0 0.0
      %1761 = vmatpush1.msra.mxu0 %v1661
      %1762 = vmatprep.subr.mxu0 0.0
      %1763 = vmatpush1.msra.mxu0 0.0
      %1764 = vmatprep.subr.mxu0 0.0
      %1765 = vmatpush1.msra.mxu0 0.0
      %1766 = vmatprep.subr.mxu0 0.0
      %1767 = vmatpush1.msra.mxu0 0.0
      %1768 = vmatprep.subr.mxu0 0.0
      %1769 = vmatpush1.msra.mxu0 0.0
      %1770 = vmatprep.subr.mxu0 0.0
      %1771 = vmatpush1.msra.mxu0 0.0
      %1772 = vmatprep.subr.mxu0 0.0
      %1773 = vmatpush1.msra.mxu0 0.0
      %1774 = vmatprep.subr.mxu0 0.0
      %1775 = vmatpush1.msra.mxu0 0.0
      %1776 = vmatprep.subr.mxu0 0.0
      %1777 = vmatpush1.msra.mxu0 0.0
      %1778 = vmatprep.subr.mxu0 0.0
      %1779 = vmatpush1.msra.mxu0 0.0
      %1780 = vmatprep.subr.mxu0 0.0
      %1781 = vmatpush1.msra.mxu0 0.0
      %1782 = vmatprep.subr.mxu0 0.0
      %1783 = vmatpush1.msra.mxu0 0.0
      %1784 = vmatprep.subr.mxu0 0.0
      %1785 = vmatpush1.msra.mxu0 0.0
      %1786 = vmatprep.subr.mxu0 0.0
      %1787 = vmatpush1.msra.mxu0 0.0
      %1788 = vmatprep.subr.mxu0 0.0
      %1789 = vmatpush1.msra.mxu0 0.0
      %1790 = vmatprep.subr.mxu0 0.0
      %1791 = vmatpush1.msra.mxu0 0.0
      %1792 = vmatprep.subr.mxu0 0.0
      %1793 = vmatpush1.msra.mxu0 0.0
      %1794 = vmatprep.subr.mxu0 0.0
      %1795 = vmatpush1.msra.mxu0 0.0
      %1796 = vmatprep.subr.mxu0 0.0
      %1797 = vmatpush1.msra.mxu0 0.0
      %1798 = vmatprep.subr.mxu0 0.0
      %1799 = vmatpush1.msra.mxu0 0.0
      %1800 = vmatprep.subr.mxu0 0.0
      %1801 = vmatpush1.msra.mxu0 0.0
      %1802 = vmatprep.subr.mxu0 0.0
      %1803 = vmatpush1.msra.mxu0 0.0
      %1804 = vmatprep.subr.mxu0 0.0
      %1805 = vmatpush1.msra.mxu0 0.0
      %1806 = vmatprep.subr.mxu0 0.0
      %1807 = vmatpush1.msra.mxu0 0.0
      %1808 = vmatprep.subr.mxu0 0.0
      %1809 = vmatpush1.msra.mxu0 0.0
      %1810 = vmatprep.mubr.f32.mxu0 0.0
      %1811 = vmatmul.mubr.f32.gmra.mrb[0].mxu0 %v1744
      %v1812 = vpop.f32.mrb[0].mxu0
      %v1813 = vadd.f32 %v1667, %v1812
      %v1814 = vpop.f32.mrb[0].mxu0
      %1815 = vdwg.mxu0
      %v1816 = vmax.f32 %v1813, 0.0
      %v1817 = vld [vmem:[%s18] sm:$0xff]
      %v1818 = vld [vmem:[%s18 + $0x8] sm:$0xff]
      %v1819 = vld [vmem:[%s18 + $0x10] sm:$0xff]
      %v1820 = vld [vmem:[%s18 + $0x18] sm:$0xff]
      %v1821 = vld [vmem:[%s19] sm:$0x1]
      %v1823 = vlaneseq
      %v1824 = vshrl.u32 %v1823, 7
      %v1825 = vsub.s32 0, %v1824
      %v1826 = vrot.slane %v1821, %v1825
      %v1829 = vsel %vm802, %v1742, 0
      %1831 = vmatprep.subr.mxu0 0.0
      %1832 = vmatpush1.msra.mxu0 %v1817
      %1833 = vmatprep.subr.mxu0 0.0
      %1834 = vmatpush1.msra.mxu0 %v1818
      %1835 = vmatprep.subr.mxu0 0.0
      %1836 = vmatpush1.msra.mxu0 %v1819
      %1837 = vmatprep.subr.mxu0 0.0
      %1838 = vmatpush1.msra.mxu0 %v1820
      %1839 = vmatprep.subr.mxu0 0.0
      %1840 = vmatpush1.msra.mxu0 0.0
      %1841 = vmatprep.subr.mxu0 0.0
      %1842 = vmatpush1.msra.mxu0 0.0
      %1843 = vmatprep.subr.mxu0 0.0
      %1844 = vmatpush1.msra.mxu0 0.0
      %1845 = vmatprep.subr.mxu0 0.0
      %1846 = vmatpush1.msra.mxu0 0.0
      %1847 = vmatprep.subr.mxu0 0.0
      %1848 = vmatpush1.msra.mxu0 0.0
      %1849 = vmatprep.subr.mxu0 0.0
      %1850 = vmatpush1.msra.mxu0 0.0
      %1851 = vmatprep.subr.mxu0 0.0
      %1852 = vmatpush1.msra.mxu0 0.0
      %1853 = vmatprep.subr.mxu0 0.0
      %1854 = vmatpush1.msra.mxu0 0.0
      %1855 = vmatprep.subr.mxu0 0.0
      %1856 = vmatpush1.msra.mxu0 0.0
      %1857 = vmatprep.subr.mxu0 0.0
      %1858 = vmatpush1.msra.mxu0 0.0
      %1859 = vmatprep.subr.mxu0 0.0
      %1860 = vmatpush1.msra.mxu0 0.0
      %1861 = vmatprep.subr.mxu0 0.0
      %1862 = vmatpush1.msra.mxu0 0.0
      %1863 = vmatprep.subr.mxu0 0.0
      %1864 = vmatpush1.msra.mxu0 0.0
      %1865 = vmatprep.subr.mxu0 0.0
      %1866 = vmatpush1.msra.mxu0 0.0
      %1867 = vmatprep.subr.mxu0 0.0
      %1868 = vmatpush1.msra.mxu0 0.0
      %1869 = vmatprep.subr.mxu0 0.0
      %1870 = vmatpush1.msra.mxu0 0.0
      %1871 = vmatprep.subr.mxu0 0.0
      %1872 = vmatpush1.msra.mxu0 0.0
      %1873 = vmatprep.subr.mxu0 0.0
      %1874 = vmatpush1.msra.mxu0 0.0
      %1875 = vmatprep.subr.mxu0 0.0
      %1876 = vmatpush1.msra.mxu0 0.0
      %1877 = vmatprep.subr.mxu0 0.0
      %1878 = vmatpush1.msra.mxu0 0.0
      %1879 = vmatprep.subr.mxu0 0.0
      %1880 = vmatpush1.msra.mxu0 0.0
      %1881 = vmatprep.subr.mxu0 0.0
      %1882 = vmatpush1.msra.mxu0 0.0
      %1883 = vmatprep.subr.mxu0 0.0
      %1884 = vmatpush1.msra.mxu0 0.0
      %1885 = vmatprep.subr.mxu0 0.0
      %1886 = vmatpush1.msra.mxu0 0.0
      %1887 = vmatprep.subr.mxu0 0.0
      %1888 = vmatpush1.msra.mxu0 0.0
      %1889 = vmatprep.subr.mxu0 0.0
      %1890 = vmatpush1.msra.mxu0 0.0
      %1891 = vmatprep.subr.mxu0 0.0
      %1892 = vmatpush1.msra.mxu0 0.0
      %1893 = vmatprep.subr.mxu0 0.0
      %1894 = vmatpush1.msra.mxu0 0.0
      %1895 = vmatprep.mubr.f32.mxu0 0.0
      %1896 = vmatmul.mubr.f32.gmra.mrb[0].mxu0 %v1829
      %v1897 = vpop.f32.mrb[0].mxu0
      %v1898 = vadd.f32 %v1826, %v1897
      %v1899 = vpop.f32.mrb[0].mxu0
      %1900 = vdwg.mxu0
      %v1902 = vsel %vm802, %v1816, 0
      %1904 = vmatprep.subr.mxu0 0.0
      %1905 = vmatpush1.msra.mxu0 %v1817
      %1906 = vmatprep.subr.mxu0 0.0
      %1907 = vmatpush1.msra.mxu0 %v1818
      %1908 = vmatprep.subr.mxu0 0.0
      %1909 = vmatpush1.msra.mxu0 %v1819
      %1910 = vmatprep.subr.mxu0 0.0
      %1911 = vmatpush1.msra.mxu0 %v1820
      %1912 = vmatprep.subr.mxu0 0.0
      %1913 = vmatpush1.msra.mxu0 0.0
      %1914 = vmatprep.subr.mxu0 0.0
      %1915 = vmatpush1.msra.mxu0 0.0
      %1916 = vmatprep.subr.mxu0 0.0
      %1917 = vmatpush1.msra.mxu0 0.0
      %1918 = vmatprep.subr.mxu0 0.0
      %1919 = vmatpush1.msra.mxu0 0.0
      %1920 = vmatprep.subr.mxu0 0.0
      %1921 = vmatpush1.msra.mxu0 0.0
      %1922 = vmatprep.subr.mxu0 0.0
      %1923 = vmatpush1.msra.mxu0 0.0
      %1924 = vmatprep.subr.mxu0 0.0
      %1925 = vmatpush1.msra.mxu0 0.0
      %1926 = vmatprep.subr.mxu0 0.0
      %1927 = vmatpush1.msra.mxu0 0.0
      %1928 = vmatprep.subr.mxu0 0.0
      %1929 = vmatpush1.msra.mxu0 0.0
      %1930 = vmatprep.subr.mxu0 0.0
      %1931 = vmatpush1.msra.mxu0 0.0
      %1932 = vmatprep.subr.mxu0 0.0
      %1933 = vmatpush1.msra.mxu0 0.0
      %1934 = vmatprep.subr.mxu0 0.0
      %1935 = vmatpush1.msra.mxu0 0.0
      %1936 = vmatprep.subr.mxu0 0.0
      %1937 = vmatpush1.msra.mxu0 0.0
      %1938 = vmatprep.subr.mxu0 0.0
      %1939 = vmatpush1.msra.mxu0 0.0
      %1940 = vmatprep.subr.mxu0 0.0
      %1941 = vmatpush1.msra.mxu0 0.0
      %1942 = vmatprep.subr.mxu0 0.0
      %1943 = vmatpush1.msra.mxu0 0.0
      %1944 = vmatprep.subr.mxu0 0.0
      %1945 = vmatpush1.msra.mxu0 0.0
      %1946 = vmatprep.subr.mxu0 0.0
      %1947 = vmatpush1.msra.mxu0 0.0
      %1948 = vmatprep.subr.mxu0 0.0
      %1949 = vmatpush1.msra.mxu0 0.0
      %1950 = vmatprep.subr.mxu0 0.0
      %1951 = vmatpush1.msra.mxu0 0.0
      %1952 = vmatprep.subr.mxu0 0.0
      %1953 = vmatpush1.msra.mxu0 0.0
      %1954 = vmatprep.subr.mxu0 0.0
      %1955 = vmatpush1.msra.mxu0 0.0
      %1956 = vmatprep.subr.mxu0 0.0
      %1957 = vmatpush1.msra.mxu0 0.0
      %1958 = vmatprep.subr.mxu0 0.0
      %1959 = vmatpush1.msra.mxu0 0.0
      %1960 = vmatprep.subr.mxu0 0.0
      %1961 = vmatpush1.msra.mxu0 0.0
      %1962 = vmatprep.subr.mxu0 0.0
      %1963 = vmatpush1.msra.mxu0 0.0
      %1964 = vmatprep.subr.mxu0 0.0
      %1965 = vmatpush1.msra.mxu0 0.0
      %1966 = vmatprep.subr.mxu0 0.0
      %1967 = vmatpush1.msra.mxu0 0.0
      %1968 = vmatprep.mubr.f32.mxu0 0.0
      %1969 = vmatmul.mubr.f32.gmra.mrb[0].mxu0 %v1902
      %v1970 = vpop.f32.mrb[0].mxu0
      %v1971 = vadd.f32 %v1826, %v1970
      %v1972 = vpop.f32.mrb[0].mxu0
      %1973 = vdwg.mxu0
      %1974 = vst [vmem:[%s695] sm:$0xff] %v1002
      %1975 = vst [vmem:[%s695 + $0x8] sm:$0xff] %v1004
      %1976 = vst [vmem:[%s695 + $0x10] sm:$0xff] %v1073
      %1977 = vst [vmem:[%s695 + $0x18] sm:$0xff] %v1075
      %1978 = vst [vmem:[%s705] sm:$0xff] %v1486
      %1979 = vst [vmem:[%s705 + $0x8] sm:$0xff] %v1898
      %1980 = vst [vmem:[%s705 + $0x10] sm:$0xff] %v1971
      %p1981 = scmp.lt.s32.totalorder %s34, 1
      %s1982 = scalar_select %p1981, %s34, 1
      %s1983 = smul.addr %s1982, 4
      %s1984 = smul.addr %s1983, 8
      %s1985 = scalar_lea.vmem %s20, %s1984
      %p1986 = scmp.lt.s32.totalorder %s34, 1
      %s1987 = scalar_select %p1986, %s34, 1
      %s1988 = smul.addr %s1987, 2
      %s1989 = smul.addr %s1988, 8
      %s1990 = scalar_lea.vmem %s21, %s1989
      %p1991 = scmp.lt.s32.totalorder %s34, 1
      %s1992 = scalar_select %p1991, %s34, 1
      %s1993 = smul.addr %s1992, 3
      %s1994 = smul.addr %s1993, 8
      %s1995 = scalar_lea.vmem %s22, %s1994
      // Predicated region
      $region101: #{odr_forward.1} parent=99 // pred_check
        %p1996 = pneg %p477
      $region102: #{odr_forward.1} parent=99 // pred_check_branch
        %1998 = sbr.rel (%p1996) target = $region104
      $region103: #{odr_forward.1} parent=99 // pred_region
        _
      $region104: #{odr_forward.1} parent=99 // pred_fallthru
        _
      // Predicated region
      $region105: #{odr_forward.1} parent=99 // pred_check
        %p1999 = pneg %p503
      $region106: #{odr_forward.1} parent=99 // pred_check_branch
        %2001 = sbr.rel (%p1999) target = $region108
      $region107: #{odr_forward.1} parent=99 // pred_region
        _
      $region108: #{odr_forward.1} parent=99 // pred_fallthru
        _
      // Predicated region
      $region109: #{odr_forward.1} parent=99 // pred_check
        %p2002 = pneg %p529
      $region110: #{odr_forward.1} parent=99 // pred_check_branch
        %2004 = sbr.rel (%p2002) target = $region112
      $region111: #{odr_forward.1} parent=99 // pred_region
        _
      $region112: #{odr_forward.1} parent=99 // pred_fallthru
        _
    $region100: #{odr_forward.1} parent=5 // pred_fallthru
      _
    %p2005 = scmp.le.s32.totalorder 2, %s29
    // Predicated region
    $region113: #{odr_forward.1} parent=5 // pred_check
      %p2006 = pneg %p2005
    $region114: #{odr_forward.1} parent=5 // pred_check_branch
      %2008 = sbr.rel (%p2006) target = $region116
    $region115: #{odr_forward.1} parent=5 // pred_region
      %s2009 = ssub.s32 %s29, 2
      // Predicated region
      $region117: #{odr_forward.1} parent=115 // pred_check
        %p2010 = pneg %p483
      $region118: #{odr_forward.1} parent=115 // pred_check_branch
        %2012 = sbr.rel (%p2010) target = $region120
      $region119: #{odr_forward.1} parent=115 // pred_region
        %p2013 = scmp.lt.s32.totalorder %s35, 1
        %s2014 = scalar_select %p2013, %s35, 1
        %s2015 = smul.addr %s2014, 4
        %s2016 = smul.addr %s2015, 8
        %s2017 = scalar_lea.vmem %s20, %s2016
      $region120: #{odr_forward.1} parent=115 // pred_fallthru
        _
      // Predicated region
      $region121: #{odr_forward.1} parent=115 // pred_check
        %p2018 = pneg %p509
      $region122: #{odr_forward.1} parent=115 // pred_check_branch
        %2020 = sbr.rel (%p2018) target = $region124
      $region123: #{odr_forward.1} parent=115 // pred_region
        %p2021 = scmp.lt.s32.totalorder %s35, 1
        %s2022 = scalar_select %p2021, %s35, 1
        %s2023 = smul.addr %s2022, 2
        %s2024 = smul.addr %s2023, 8
        %s2025 = scalar_lea.vmem %s21, %s2024
      $region124: #{odr_forward.1} parent=115 // pred_fallthru
        _
      // Predicated region
      $region125: #{odr_forward.1} parent=115 // pred_check
        %p2026 = pneg %p535
      $region126: #{odr_forward.1} parent=115 // pred_check_branch
        %2028 = sbr.rel (%p2026) target = $region128
      $region127: #{odr_forward.1} parent=115 // pred_region
        %p2029 = scmp.lt.s32.totalorder %s35, 1
        %s2030 = scalar_select %p2029, %s35, 1
        %s2031 = smul.addr %s2030, 3
        %s2032 = smul.addr %s2031, 8
        %s2033 = scalar_lea.vmem %s22, %s2032
      $region128: #{odr_forward.1} parent=115 // pred_fallthru
        _
    $region116: #{odr_forward.1} parent=5 // pred_fallthru
      _
  $region6: #{odr_forward.1} parent=0 // loop_footer
    %s33 = sadd.s32 1, %s29
  $region7: #{odr_forward.1} parent=0 // loop_footer_branch
    %28 = sbr.rel target = $region3
  $region8: #{odr_forward.1} parent=0 // loop_exit
    _

</llo_original>
